<compile_context>
chip_gen: v5e
topology: v5e:2x2
jax: 0.10.0
libtpu: 0.0.40
codegen_flags: <defaults>
</compile_context>

<pallas_src>
import functools

import numpy as np
import jax
import jax.numpy as jnp
from jax import lax
from jax.experimental import pallas as pl
from jax.experimental.pallas import tpu as pltpu

BLOCK_SIZE = 8
_DEFAULT_BUDGET = 24 * 1024 * 1024   # working-set budget for one block


def _choose_tiling(P, H, W, itemsize, budget_bytes=_DEFAULT_BUDGET):
    """Pick (TP, TH): planes per block and rows per block."""
    # Per-element VMEM cost: 2 inputs x 2 pipeline buffers in native dtype
    # plus ~8 f32 temporaries inside the kernel body.
    bytes_per_elem = 4 * itemsize + 8 * 4
    max_elems = max(budget_bytes // bytes_per_elem, BLOCK_SIZE * max(W, 1))
    # Small planes: batch several (b, c) planes into one grid step (amortise
    # per-step overhead, bigger DMAs).  Cap plane unrolling at 8.
    if H * W <= max_elems:
        for cand in range(min(P, 8), 0, -1):
            if P % cand == 0 and cand * H * W <= max_elems:
                return cand, H
    # Tile over H: largest divisor of H that is a multiple of 8 and fits.
    if H % BLOCK_SIZE == 0:
        best = None
        for cand in range(BLOCK_SIZE, H, BLOCK_SIZE):
            if H % cand == 0 and cand * W <= max_elems:
                best = cand
        if best is not None:
            return 1, best
    # Fallback: full plane (exotic shapes only).
    return 1, H


def _psnrb_kernel(x_ref, y_ref, sse_ref, bsum_ref, tsum_ref, carry_ref,
                  *, n_h_tiles: int):
    """Reduce one (TP, TH, W) tile to 3 per-plane scalars (in SMEM).

    sse_ref  : sum((x - y)^2)                                    per plane
    bsum_ref : sum of squared neighbour diffs of x on 8-px block boundaries
    tsum_ref : sum of squared neighbour diffs of x over ALL neighbour pairs
    Accumulated across the (arbitrary) H-tile grid axis.
    """
    h = pl.program_id(1)
    x = x_ref[...].astype(jnp.float32)            # (TP, TH, W)
    y = y_ref[...].astype(jnp.float32)
    TP, TH, W = x.shape

    # --- per-pixel squared error vs. target ---
    d = x - y
    d2 = d * d

    # --- horizontal neighbour diffs of the *input* plane ---
    dh = x[:, :, :-1] - x[:, :, 1:]               # (TP, TH, W-1): pair (j, j+1)
    dh2 = dh * dh
    col = lax.broadcasted_iota(jnp.int32, dh2.shape, 2)
    # block-boundary columns: j % 8 == 7 (j <= W-2 automatically)
    dh2_bnd = jnp.where((col % BLOCK_SIZE) == (BLOCK_SIZE - 1), dh2, 0.0)

    # --- vertical neighbour diffs of the *input* plane (intra-tile) ---
    dv = x[:, :-1, :] - x[:, 1:, :]               # (TP, TH-1, W): pair (i, i+1)
    dv2 = dv * dv
    row = lax.broadcasted_iota(jnp.int32, dv2.shape, 1)
    # When tiling, TH % 8 == 0 and the tile offset is a multiple of TH, so the
    # local row index decides boundary membership (global % 8 == local % 8).
    dv2_bnd = jnp.where((row % BLOCK_SIZE) == (BLOCK_SIZE - 1), dv2, 0.0)

    sse_p = [jnp.sum(d2[p]) for p in range(TP)]
    tot_p = [jnp.sum(dh2[p]) + jnp.sum(dv2[p]) for p in range(TP)]
    bnd_p = [jnp.sum(dh2_bnd[p]) + jnp.sum(dv2_bnd[p]) for p in range(TP)]

    @pl.when(h == 0)
    def _init():
        for p in range(TP):
            sse_ref[0, p] = sse_p[p]
            tsum_ref[0, p] = tot_p[p]
            bsum_ref[0, p] = bnd_p[p]

    if n_h_tiles > 1:
        @pl.when(h > 0)
        def _accumulate():
            # Seam between the previous tile's last row and this tile's first
            # row; always an 8-px block boundary because TH % 8 == 0.
            seam = carry_ref[...] - x[:, 0:1, :]          # (TP, 1, W)
            seam2 = seam * seam
            for p in range(TP):
                s = jnp.sum(seam2[p])
                sse_ref[0, p] += sse_p[p]
                tsum_ref[0, p] += tot_p[p] + s
                bsum_ref[0, p] += bnd_p[p] + s

        # Carry this tile's last row for the next tile's seam term.
        carry_ref[...] = x[:, TH - 1:TH, :]


def psnrb(input_tensor, target_tensor, *, vmem_budget_bytes=_DEFAULT_BUDGET):
    """PSNR-B, matching the PyTorch PSNRB.forward semantics. Returns (B,) f32."""
    B, C, H, W = input_tensor.shape
    P = B * C
    itemsize = max(np.dtype(input_tensor.dtype).itemsize,
                   np.dtype(target_tensor.dtype).itemsize)

    TP, TH = _choose_tiling(P, H, W, itemsize, vmem_budget_bytes)
    n_p = P // TP
    nh = H // TH

    # Metadata-only reshape: merge (B, C) into a single plane axis.
    x = input_tensor.reshape(P, H, W)
    y = target_tensor.reshape(P, H, W)

    plane_spec = pl.BlockSpec((TP, TH, W), lambda p, h: (p, h, 0))
    smem_spec = pl.BlockSpec((1, TP), lambda p, h: (p, 0),
                             memory_space=pltpu.SMEM)
    scalar_out = jax.ShapeDtypeStruct((n_p, TP), jnp.float32)

    # Explicit scoped-VMEM limit: 2 inputs x 2 buffers (native dtype) + ~8 f32
    # temporaries + carry row, with headroom (clamped to 32-48 MiB so it is
    # safe on v5e/v6e/v7x alike).
    block_elems = TP * TH * W
    est = (2 * 2 * block_elems * itemsize
           + 8 * block_elems * 4
           + TP * W * 4 + (1 << 20))
    vmem_limit = int(min(max(2 * est, 32 * 1024 * 1024), 48 * 1024 * 1024))

    kernel = functools.partial(_psnrb_kernel, n_h_tiles=nh)

    sse, bsum, tsum = pl.pallas_call(
        kernel,
        out_shape=(scalar_out,) * 3,
        grid=(n_p, nh),
        in_specs=[plane_spec, plane_spec],
        out_specs=(smem_spec,) * 3,
        scratch_shapes=[pltpu.VMEM((TP, 1, W), jnp.float32)],
        compiler_params=pltpu.CompilerParams(
            dimension_semantics=("parallel", "arbitrary"),
            vmem_limit_bytes=vmem_limit),
    )(x, y)                                  # native dtype in; upcast in-kernel

    sse = sse.reshape(B, C)
    bsum = bsum.reshape(B, C)
    tsum = tsum.reshape(B, C)

    # ---- scalar glue (matches blocking_effect_factor + forward) ----
    mse = sse / float(H * W)                                   # (B, C)

    n_boundary_horiz = H * (W // BLOCK_SIZE - 1)
    n_boundary_vert = W * (H // BLOCK_SIZE - 1)
    n_boundary = n_boundary_horiz + n_boundary_vert
    n_total = H * (W - 1) + W * (H - 1)
    n_nonboundary = n_total - n_boundary

    boundary_diff = bsum / float(n_boundary)
    nonboundary_diff = (tsum - bsum) / float(n_nonboundary)

    scaler = np.log2(BLOCK_SIZE) / np.log2(min(H, W))
    bef = scaler * (boundary_diff - nonboundary_diff)
    bef = jnp.where(boundary_diff <= nonboundary_diff, 0.0, bef)   # (B, C)

    psnr_per_channel = 10.0 * jnp.log10(1.0 / (mse + bef))         # (B, C)
    return jnp.mean(psnr_per_channel, axis=1)                      # (B,)


def _psnrb_reference(x, y):
    """Pure-JAX reference mirroring the PyTorch code, for verification."""
    B, C, H, W = x.shape
    total = jnp.zeros((B,), jnp.float32)
    hpos = np.arange(7, W - 1, 8)
    vpos = np.arange(7, H - 1, 8)
    nh_ = np.setdiff1d(np.arange(0, W - 1), hpos)
    nv_ = np.setdiff1d(np.arange(0, H - 1), vpos)
    for c in range(C):
        ic = x[:, c, :, :].astype(jnp.float32)
        tc = y[:, c, :, :].astype(jnp.float32)
        mse = jnp.mean((ic - tc) ** 2, axis=(1, 2))
        hb = jnp.sum((ic[:, :, hpos] - ic[:, :, hpos + 1]) ** 2, axis=(1, 2))
        vb = jnp.sum((ic[:, vpos, :] - ic[:, vpos + 1, :]) ** 2, axis=(1, 2))
        hn = jnp.sum((ic[:, :, nh_] - ic[:, :, nh_ + 1]) ** 2, axis=(1, 2))
        vn = jnp.sum((ic[:, nv_, :] - ic[:, nv_ + 1, :]) ** 2, axis=(1, 2))
        nbh = H * (W // 8 - 1)
        nbv = W * (H // 8 - 1)
        bd = (hb + vb) / (nbh + nbv)
        nbd = (hn + vn) / (H * (W - 1) - nbh + W * (H - 1) - nbv)
        scaler = np.log2(8) / np.log2(min(H, W))
        bef = scaler * (bd - nbd)
        bef = jnp.where(bd <= nbd, 0.0, bef)
        total = total + 10.0 * jnp.log10(1.0 / (mse + bef))
    return total / C


if __name__ == "__main__":
    key = jax.random.PRNGKey(0)
    k1, k2, k3, k4 = jax.random.split(key, 4)

    # --- test 1: small planes, all (B, C) planes batched into one grid step ---
    B, C, H, W = 2, 4, 16, 16
    x = jax.random.uniform(k1, (B, C, H, W), dtype=jnp.float32)
    y = jnp.clip(x + 0.05 * jax.random.normal(k2, (B, C, H, W),
                                              dtype=jnp.float32), 0.0, 1.0)
    out = jax.block_until_ready(psnrb(x, y))
    ref = jax.block_until_ready(_psnrb_reference(x, y))
    np.testing.assert_allclose(np.asarray(out), np.asarray(ref),
                               rtol=1e-4, atol=1e-4)

    # --- test 2: tiny VMEM budget forces H tiling -> exercises the seam /
    #     accumulation path across H-tile boundaries. ---
    B2, C2, H2, W2 = 1, 2, 32, 128
    x2 = jax.random.uniform(k3, (B2, C2, H2, W2), dtype=jnp.float32)
    y2 = jnp.clip(x2 + 0.05 * jax.random.normal(k4, (B2, C2, H2, W2),
                                                dtype=jnp.float32), 0.0, 1.0)
    out2 = jax.block_until_ready(psnrb(x2, y2, vmem_budget_bytes=64 * 1024))
    ref2 = jax.block_until_ready(_psnrb_reference(x2, y2))
    np.testing.assert_allclose(np.asarray(out2), np.asarray(ref2),
                               rtol=1e-4, atol=1e-4)

    print("KERNEL_OK")
</pallas_src>

<mosaic_0001>
module attributes {stable_mosaic.version = 11 : i64} {
  func.func @_psnrb_kernel(%arg0: i32, %arg1: i32, %arg2: memref<8x16x16xf32, #tpu.memory_space<vmem>>, %arg3: memref<8x16x16xf32, #tpu.memory_space<vmem>>, %arg4: memref<1x8xf32, #tpu.memory_space<smem>>, %arg5: memref<1x8xf32, #tpu.memory_space<smem>>, %arg6: memref<1x8xf32, #tpu.memory_space<smem>>, %arg7: memref<8x1x16xf32, #tpu.memory_space<vmem>>) attributes {dimension_semantics = [#tpu.dimension_semantics<parallel>, #tpu.dimension_semantics<arbitrary>], iteration_bounds = array<i64: 1, 1>, scalar_prefetch = 0 : i64, scratch_operands = 1 : i64, tpu.core_type = #tpu.core_type<tc>, window_params = [{transform_indices = @transform_0, window_bounds = array<i64: 8, 16, 16>}, {transform_indices = @transform_1, window_bounds = array<i64: 8, 16, 16>}, {transform_indices = @transform_2, window_bounds = array<i64: 1, 8>}, {transform_indices = @transform_3, window_bounds = array<i64: 1, 8>}, {transform_indices = @transform_4, window_bounds = array<i64: 1, 8>}]} {
    %c0 = arith.constant 0 : index
    %c0_0 = arith.constant 0 : index
    %c0_1 = arith.constant 0 : index
    %0 = vector.load %arg2[%c0, %c0_0, %c0_1] : memref<8x16x16xf32, #tpu.memory_space<vmem>>, vector<8x16x16xf32>
    %c0_2 = arith.constant 0 : index
    %c0_3 = arith.constant 0 : index
    %c0_4 = arith.constant 0 : index
    %1 = vector.load %arg3[%c0_2, %c0_3, %c0_4] : memref<8x16x16xf32, #tpu.memory_space<vmem>>, vector<8x16x16xf32>
    %2 = arith.subf %0, %1 : vector<8x16x16xf32>
    %3 = arith.mulf %2, %2 : vector<8x16x16xf32>
    %4 = vector.extract_strided_slice %0 {offsets = [0, 0, 0], sizes = [8, 16, 15], strides = [1, 1, 1]} : vector<8x16x16xf32> to vector<8x16x15xf32>
    %5 = vector.extract_strided_slice %0 {offsets = [0, 0, 1], sizes = [8, 16, 15], strides = [1, 1, 1]} : vector<8x16x16xf32> to vector<8x16x15xf32>
    %6 = arith.subf %4, %5 : vector<8x16x15xf32>
    %7 = arith.mulf %6, %6 : vector<8x16x15xf32>
    %8 = tpu.iota {dimensions = array<i32: 2>} : vector<8x16x15xi32>
    %c8_i32 = arith.constant 8 : i32
    %c0_i32 = arith.constant 0 : i32
    %9 = arith.cmpi eq, %c8_i32, %c0_i32 : i32
    %c1_i32 = arith.constant 1 : i32
    %10 = arith.select %9, %c1_i32, %c8_i32 : i32
    %11 = vector.broadcast %10 : i32 to vector<8x16x15xi32>
    %12 = arith.remsi %8, %11 : vector<8x16x15xi32>
    %c0_i32_5 = arith.constant 0 : i32
    %13 = vector.broadcast %c0_i32_5 : i32 to vector<8x16x15xi32>
    %14 = arith.cmpi ne, %12, %13 : vector<8x16x15xi32>
    %c0_i32_6 = arith.constant 0 : i32
    %15 = vector.broadcast %c0_i32_6 : i32 to vector<8x16x15xi32>
    %16 = arith.cmpi slt, %12, %15 : vector<8x16x15xi32>
    %c0_i32_7 = arith.constant 0 : i32
    %17 = arith.cmpi slt, %10, %c0_i32_7 : i32
    %18 = vector.broadcast %17 : i1 to vector<8x16x15xi1>
    %19 = vector.broadcast %18 : vector<8x16x15xi1> to vector<8x16x15xi1>
    %20 = arith.xori %16, %19 : vector<8x16x15xi1>
    %21 = arith.andi %20, %14 : vector<8x16x15xi1>
    %22 = vector.broadcast %10 : i32 to vector<8x16x15xi32>
    %23 = arith.addi %12, %22 : vector<8x16x15xi32>
    %24 = arith.select %21, %23, %12 : vector<8x16x15xi1>, vector<8x16x15xi32>
    %c7_i32 = arith.constant 7 : i32
    %25 = vector.broadcast %c7_i32 : i32 to vector<8x16x15xi32>
    %26 = arith.cmpi eq, %24, %25 : vector<8x16x15xi32>
    %cst = arith.constant 0.000000e+00 : f32
    %27 = vector.broadcast %cst : f32 to vector<8x16x15xf32>
    %28 = arith.select %26, %7, %27 : vector<8x16x15xi1>, vector<8x16x15xf32>
    %29 = vector.extract_strided_slice %0 {offsets = [0, 0, 0], sizes = [8, 15, 16], strides = [1, 1, 1]} : vector<8x16x16xf32> to vector<8x15x16xf32>
    %30 = vector.extract_strided_slice %0 {offsets = [0, 1, 0], sizes = [8, 15, 16], strides = [1, 1, 1]} : vector<8x16x16xf32> to vector<8x15x16xf32>
    %31 = arith.subf %29, %30 : vector<8x15x16xf32>
    %32 = arith.mulf %31, %31 : vector<8x15x16xf32>
    %33 = tpu.iota {dimensions = array<i32: 1>} : vector<8x15x16xi32>
    %c8_i32_8 = arith.constant 8 : i32
    %c0_i32_9 = arith.constant 0 : i32
    %34 = arith.cmpi eq, %c8_i32_8, %c0_i32_9 : i32
    %c1_i32_10 = arith.constant 1 : i32
    %35 = arith.select %34, %c1_i32_10, %c8_i32_8 : i32
    %36 = vector.broadcast %35 : i32 to vector<8x15x16xi32>
    %37 = arith.remsi %33, %36 : vector<8x15x16xi32>
    %c0_i32_11 = arith.constant 0 : i32
    %38 = vector.broadcast %c0_i32_11 : i32 to vector<8x15x16xi32>
    %39 = arith.cmpi ne, %37, %38 : vector<8x15x16xi32>
    %c0_i32_12 = arith.constant 0 : i32
    %40 = vector.broadcast %c0_i32_12 : i32 to vector<8x15x16xi32>
    %41 = arith.cmpi slt, %37, %40 : vector<8x15x16xi32>
    %c0_i32_13 = arith.constant 0 : i32
    %42 = arith.cmpi slt, %35, %c0_i32_13 : i32
    %43 = vector.broadcast %42 : i1 to vector<8x15x16xi1>
    %44 = vector.broadcast %43 : vector<8x15x16xi1> to vector<8x15x16xi1>
    %45 = arith.xori %41, %44 : vector<8x15x16xi1>
    %46 = arith.andi %45, %39 : vector<8x15x16xi1>
    %47 = vector.broadcast %35 : i32 to vector<8x15x16xi32>
    %48 = arith.addi %37, %47 : vector<8x15x16xi32>
    %49 = arith.select %46, %48, %37 : vector<8x15x16xi1>, vector<8x15x16xi32>
    %c7_i32_14 = arith.constant 7 : i32
    %50 = vector.broadcast %c7_i32_14 : i32 to vector<8x15x16xi32>
    %51 = arith.cmpi eq, %49, %50 : vector<8x15x16xi32>
    %cst_15 = arith.constant 0.000000e+00 : f32
    %52 = vector.broadcast %cst_15 : f32 to vector<8x15x16xf32>
    %53 = arith.select %51, %32, %52 : vector<8x15x16xi1>, vector<8x15x16xf32>
    %54 = vector.extract_strided_slice %3 {offsets = [0, 0, 0], sizes = [1, 16, 16], strides = [1, 1, 1]} : vector<8x16x16xf32> to vector<1x16x16xf32>
    %55 = vector.shape_cast %54 : vector<1x16x16xf32> to vector<16x16xf32>
    %56 = vector.shape_cast %55 : vector<16x16xf32> to vector<1x16x16xf32>
    %cst_16 = arith.constant dense<0.000000e+00> : vector<1xf32>
    %57 = vector.multi_reduction <add>, %56, %cst_16 [1, 2] : vector<1x16x16xf32> to vector<1xf32>
    %58 = vector.shape_cast %57 : vector<1xf32> to vector<1x1x1xf32>
    %59 = vector.extract %58[0, 0, 0] : f32 from vector<1x1x1xf32>
    %60 = vector.extract_strided_slice %3 {offsets = [1, 0, 0], sizes = [1, 16, 16], strides = [1, 1, 1]} : vector<8x16x16xf32> to vector<1x16x16xf32>
    %61 = vector.shape_cast %60 : vector<1x16x16xf32> to vector<16x16xf32>
    %62 = vector.shape_cast %61 : vector<16x16xf32> to vector<1x16x16xf32>
    %cst_17 = arith.constant dense<0.000000e+00> : vector<1xf32>
    %63 = vector.multi_reduction <add>, %62, %cst_17 [1, 2] : vector<1x16x16xf32> to vector<1xf32>
    %64 = vector.shape_cast %63 : vector<1xf32> to vector<1x1x1xf32>
    %65 = vector.extract %64[0, 0, 0] : f32 from vector<1x1x1xf32>
    %66 = vector.extract_strided_slice %3 {offsets = [2, 0, 0], sizes = [1, 16, 16], strides = [1, 1, 1]} : vector<8x16x16xf32> to vector<1x16x16xf32>
    %67 = vector.shape_cast %66 : vector<1x16x16xf32> to vector<16x16xf32>
    %68 = vector.shape_cast %67 : vector<16x16xf32> to vector<1x16x16xf32>
    %cst_18 = arith.constant dense<0.000000e+00> : vector<1xf32>
    %69 = vector.multi_reduction <add>, %68, %cst_18 [1, 2] : vector<1x16x16xf32> to vector<1xf32>
    %70 = vector.shape_cast %69 : vector<1xf32> to vector<1x1x1xf32>
    %71 = vector.extract %70[0, 0, 0] : f32 from vector<1x1x1xf32>
    %72 = vector.extract_strided_slice %3 {offsets = [3, 0, 0], sizes = [1, 16, 16], strides = [1, 1, 1]} : vector<8x16x16xf32> to vector<1x16x16xf32>
    %73 = vector.shape_cast %72 : vector<1x16x16xf32> to vector<16x16xf32>
    %74 = vector.shape_cast %73 : vector<16x16xf32> to vector<1x16x16xf32>
    %cst_19 = arith.constant dense<0.000000e+00> : vector<1xf32>
    %75 = vector.multi_reduction <add>, %74, %cst_19 [1, 2] : vector<1x16x16xf32> to vector<1xf32>
    %76 = vector.shape_cast %75 : vector<1xf32> to vector<1x1x1xf32>
    %77 = vector.extract %76[0, 0, 0] : f32 from vector<1x1x1xf32>
    %78 = vector.extract_strided_slice %3 {offsets = [4, 0, 0], sizes = [1, 16, 16], strides = [1, 1, 1]} : vector<8x16x16xf32> to vector<1x16x16xf32>
    %79 = vector.shape_cast %78 : vector<1x16x16xf32> to vector<16x16xf32>
    %80 = vector.shape_cast %79 : vector<16x16xf32> to vector<1x16x16xf32>
    %cst_20 = arith.constant dense<0.000000e+00> : vector<1xf32>
    %81 = vector.multi_reduction <add>, %80, %cst_20 [1, 2] : vector<1x16x16xf32> to vector<1xf32>
    %82 = vector.shape_cast %81 : vector<1xf32> to vector<1x1x1xf32>
    %83 = vector.extract %82[0, 0, 0] : f32 from vector<1x1x1xf32>
    %84 = vector.extract_strided_slice %3 {offsets = [5, 0, 0], sizes = [1, 16, 16], strides = [1, 1, 1]} : vector<8x16x16xf32> to vector<1x16x16xf32>
    %85 = vector.shape_cast %84 : vector<1x16x16xf32> to vector<16x16xf32>
    %86 = vector.shape_cast %85 : vector<16x16xf32> to vector<1x16x16xf32>
    %cst_21 = arith.constant dense<0.000000e+00> : vector<1xf32>
    %87 = vector.multi_reduction <add>, %86, %cst_21 [1, 2] : vector<1x16x16xf32> to vector<1xf32>
    %88 = vector.shape_cast %87 : vector<1xf32> to vector<1x1x1xf32>
    %89 = vector.extract %88[0, 0, 0] : f32 from vector<1x1x1xf32>
    %90 = vector.extract_strided_slice %3 {offsets = [6, 0, 0], sizes = [1, 16, 16], strides = [1, 1, 1]} : vector<8x16x16xf32> to vector<1x16x16xf32>
    %91 = vector.shape_cast %90 : vector<1x16x16xf32> to vector<16x16xf32>
    %92 = vector.shape_cast %91 : vector<16x16xf32> to vector<1x16x16xf32>
    %cst_22 = arith.constant dense<0.000000e+00> : vector<1xf32>
    %93 = vector.multi_reduction <add>, %92, %cst_22 [1, 2] : vector<1x16x16xf32> to vector<1xf32>
    %94 = vector.shape_cast %93 : vector<1xf32> to vector<1x1x1xf32>
    %95 = vector.extract %94[0, 0, 0] : f32 from vector<1x1x1xf32>
    %96 = vector.extract_strided_slice %3 {offsets = [7, 0, 0], sizes = [1, 16, 16], strides = [1, 1, 1]} : vector<8x16x16xf32> to vector<1x16x16xf32>
    %97 = vector.shape_cast %96 : vector<1x16x16xf32> to vector<16x16xf32>
    %98 = vector.shape_cast %97 : vector<16x16xf32> to vector<1x16x16xf32>
    %cst_23 = arith.constant dense<0.000000e+00> : vector<1xf32>
    %99 = vector.multi_reduction <add>, %98, %cst_23 [1, 2] : vector<1x16x16xf32> to vector<1xf32>
    %100 = vector.shape_cast %99 : vector<1xf32> to vector<1x1x1xf32>
    %101 = vector.extract %100[0, 0, 0] : f32 from vector<1x1x1xf32>
    %102 = vector.extract_strided_slice %7 {offsets = [0, 0, 0], sizes = [1, 16, 15], strides = [1, 1, 1]} : vector<8x16x15xf32> to vector<1x16x15xf32>
    %103 = vector.shape_cast %102 : vector<1x16x15xf32> to vector<16x15xf32>
    %104 = vector.shape_cast %103 : vector<16x15xf32> to vector<1x16x15xf32>
    %cst_24 = arith.constant dense<0.000000e+00> : vector<1xf32>
    %105 = vector.multi_reduction <add>, %104, %cst_24 [1, 2] : vector<1x16x15xf32> to vector<1xf32>
    %106 = vector.shape_cast %105 : vector<1xf32> to vector<1x1x1xf32>
    %107 = vector.extract %106[0, 0, 0] : f32 from vector<1x1x1xf32>
    %108 = vector.extract_strided_slice %32 {offsets = [0, 0, 0], sizes = [1, 15, 16], strides = [1, 1, 1]} : vector<8x15x16xf32> to vector<1x15x16xf32>
    %109 = vector.shape_cast %108 : vector<1x15x16xf32> to vector<15x16xf32>
    %110 = vector.shape_cast %109 : vector<15x16xf32> to vector<1x15x16xf32>
    %cst_25 = arith.constant dense<0.000000e+00> : vector<1xf32>
    %111 = vector.multi_reduction <add>, %110, %cst_25 [1, 2] : vector<1x15x16xf32> to vector<1xf32>
    %112 = vector.shape_cast %111 : vector<1xf32> to vector<1x1x1xf32>
    %113 = vector.extract %112[0, 0, 0] : f32 from vector<1x1x1xf32>
    %114 = arith.addf %107, %113 : f32
    %115 = vector.extract_strided_slice %7 {offsets = [1, 0, 0], sizes = [1, 16, 15], strides = [1, 1, 1]} : vector<8x16x15xf32> to vector<1x16x15xf32>
    %116 = vector.shape_cast %115 : vector<1x16x15xf32> to vector<16x15xf32>
    %117 = vector.shape_cast %116 : vector<16x15xf32> to vector<1x16x15xf32>
    %cst_26 = arith.constant dense<0.000000e+00> : vector<1xf32>
    %118 = vector.multi_reduction <add>, %117, %cst_26 [1, 2] : vector<1x16x15xf32> to vector<1xf32>
    %119 = vector.shape_cast %118 : vector<1xf32> to vector<1x1x1xf32>
    %120 = vector.extract %119[0, 0, 0] : f32 from vector<1x1x1xf32>
    %121 = vector.extract_strided_slice %32 {offsets = [1, 0, 0], sizes = [1, 15, 16], strides = [1, 1, 1]} : vector<8x15x16xf32> to vector<1x15x16xf32>
    %122 = vector.shape_cast %121 : vector<1x15x16xf32> to vector<15x16xf32>
    %123 = vector.shape_cast %122 : vector<15x16xf32> to vector<1x15x16xf32>
    %cst_27 = arith.constant dense<0.000000e+00> : vector<1xf32>
    %124 = vector.multi_reduction <add>, %123, %cst_27 [1, 2] : vector<1x15x16xf32> to vector<1xf32>
    %125 = vector.shape_cast %124 : vector<1xf32> to vector<1x1x1xf32>
    %126 = vector.extract %125[0, 0, 0] : f32 from vector<1x1x1xf32>
    %127 = arith.addf %120, %126 : f32
    %128 = vector.extract_strided_slice %7 {offsets = [2, 0, 0], sizes = [1, 16, 15], strides = [1, 1, 1]} : vector<8x16x15xf32> to vector<1x16x15xf32>
    %129 = vector.shape_cast %128 : vector<1x16x15xf32> to vector<16x15xf32>
    %130 = vector.shape_cast %129 : vector<16x15xf32> to vector<1x16x15xf32>
    %cst_28 = arith.constant dense<0.000000e+00> : vector<1xf32>
    %131 = vector.multi_reduction <add>, %130, %cst_28 [1, 2] : vector<1x16x15xf32> to vector<1xf32>
    %132 = vector.shape_cast %131 : vector<1xf32> to vector<1x1x1xf32>
    %133 = vector.extract %132[0, 0, 0] : f32 from vector<1x1x1xf32>
    %134 = vector.extract_strided_slice %32 {offsets = [2, 0, 0], sizes = [1, 15, 16], strides = [1, 1, 1]} : vector<8x15x16xf32> to vector<1x15x16xf32>
    %135 = vector.shape_cast %134 : vector<1x15x16xf32> to vector<15x16xf32>
    %136 = vector.shape_cast %135 : vector<15x16xf32> to vector<1x15x16xf32>
    %cst_29 = arith.constant dense<0.000000e+00> : vector<1xf32>
    %137 = vector.multi_reduction <add>, %136, %cst_29 [1, 2] : vector<1x15x16xf32> to vector<1xf32>
    %138 = vector.shape_cast %137 : vector<1xf32> to vector<1x1x1xf32>
    %139 = vector.extract %138[0, 0, 0] : f32 from vector<1x1x1xf32>
    %140 = arith.addf %133, %139 : f32
    %141 = vector.extract_strided_slice %7 {offsets = [3, 0, 0], sizes = [1, 16, 15], strides = [1, 1, 1]} : vector<8x16x15xf32> to vector<1x16x15xf32>
    %142 = vector.shape_cast %141 : vector<1x16x15xf32> to vector<16x15xf32>
    %143 = vector.shape_cast %142 : vector<16x15xf32> to vector<1x16x15xf32>
    %cst_30 = arith.constant dense<0.000000e+00> : vector<1xf32>
    %144 = vector.multi_reduction <add>, %143, %cst_30 [1, 2] : vector<1x16x15xf32> to vector<1xf32>
    %145 = vector.shape_cast %144 : vector<1xf32> to vector<1x1x1xf32>
    %146 = vector.extract %145[0, 0, 0] : f32 from vector<1x1x1xf32>
    %147 = vector.extract_strided_slice %32 {offsets = [3, 0, 0], sizes = [1, 15, 16], strides = [1, 1, 1]} : vector<8x15x16xf32> to vector<1x15x16xf32>
    %148 = vector.shape_cast %147 : vector<1x15x16xf32> to vector<15x16xf32>
    %149 = vector.shape_cast %148 : vector<15x16xf32> to vector<1x15x16xf32>
    %cst_31 = arith.constant dense<0.000000e+00> : vector<1xf32>
    %150 = vector.multi_reduction <add>, %149, %cst_31 [1, 2] : vector<1x15x16xf32> to vector<1xf32>
    %151 = vector.shape_cast %150 : vector<1xf32> to vector<1x1x1xf32>
    %152 = vector.extract %151[0, 0, 0] : f32 from vector<1x1x1xf32>
    %153 = arith.addf %146, %152 : f32
    %154 = vector.extract_strided_slice %7 {offsets = [4, 0, 0], sizes = [1, 16, 15], strides = [1, 1, 1]} : vector<8x16x15xf32> to vector<1x16x15xf32>
    %155 = vector.shape_cast %154 : vector<1x16x15xf32> to vector<16x15xf32>
    %156 = vector.shape_cast %155 : vector<16x15xf32> to vector<1x16x15xf32>
    %cst_32 = arith.constant dense<0.000000e+00> : vector<1xf32>
    %157 = vector.multi_reduction <add>, %156, %cst_32 [1, 2] : vector<1x16x15xf32> to vector<1xf32>
    %158 = vector.shape_cast %157 : vector<1xf32> to vector<1x1x1xf32>
    %159 = vector.extract %158[0, 0, 0] : f32 from vector<1x1x1xf32>
    %160 = vector.extract_strided_slice %32 {offsets = [4, 0, 0], sizes = [1, 15, 16], strides = [1, 1, 1]} : vector<8x15x16xf32> to vector<1x15x16xf32>
    %161 = vector.shape_cast %160 : vector<1x15x16xf32> to vector<15x16xf32>
    %162 = vector.shape_cast %161 : vector<15x16xf32> to vector<1x15x16xf32>
    %cst_33 = arith.constant dense<0.000000e+00> : vector<1xf32>
    %163 = vector.multi_reduction <add>, %162, %cst_33 [1, 2] : vector<1x15x16xf32> to vector<1xf32>
    %164 = vector.shape_cast %163 : vector<1xf32> to vector<1x1x1xf32>
    %165 = vector.extract %164[0, 0, 0] : f32 from vector<1x1x1xf32>
    %166 = arith.addf %159, %165 : f32
    %167 = vector.extract_strided_slice %7 {offsets = [5, 0, 0], sizes = [1, 16, 15], strides = [1, 1, 1]} : vector<8x16x15xf32> to vector<1x16x15xf32>
    %168 = vector.shape_cast %167 : vector<1x16x15xf32> to vector<16x15xf32>
    %169 = vector.shape_cast %168 : vector<16x15xf32> to vector<1x16x15xf32>
    %cst_34 = arith.constant dense<0.000000e+00> : vector<1xf32>
    %170 = vector.multi_reduction <add>, %169, %cst_34 [1, 2] : vector<1x16x15xf32> to vector<1xf32>
    %171 = vector.shape_cast %170 : vector<1xf32> to vector<1x1x1xf32>
    %172 = vector.extract %171[0, 0, 0] : f32 from vector<1x1x1xf32>
    %173 = vector.extract_strided_slice %32 {offsets = [5, 0, 0], sizes = [1, 15, 16], strides = [1, 1, 1]} : vector<8x15x16xf32> to vector<1x15x16xf32>
    %174 = vector.shape_cast %173 : vector<1x15x16xf32> to vector<15x16xf32>
    %175 = vector.shape_cast %174 : vector<15x16xf32> to vector<1x15x16xf32>
    %cst_35 = arith.constant dense<0.000000e+00> : vector<1xf32>
    %176 = vector.multi_reduction <add>, %175, %cst_35 [1, 2] : vector<1x15x16xf32> to vector<1xf32>
    %177 = vector.shape_cast %176 : vector<1xf32> to vector<1x1x1xf32>
    %178 = vector.extract %177[0, 0, 0] : f32 from vector<1x1x1xf32>
    %179 = arith.addf %172, %178 : f32
    %180 = vector.extract_strided_slice %7 {offsets = [6, 0, 0], sizes = [1, 16, 15], strides = [1, 1, 1]} : vector<8x16x15xf32> to vector<1x16x15xf32>
    %181 = vector.shape_cast %180 : vector<1x16x15xf32> to vector<16x15xf32>
    %182 = vector.shape_cast %181 : vector<16x15xf32> to vector<1x16x15xf32>
    %cst_36 = arith.constant dense<0.000000e+00> : vector<1xf32>
    %183 = vector.multi_reduction <add>, %182, %cst_36 [1, 2] : vector<1x16x15xf32> to vector<1xf32>
    %184 = vector.shape_cast %183 : vector<1xf32> to vector<1x1x1xf32>
    %185 = vector.extract %184[0, 0, 0] : f32 from vector<1x1x1xf32>
    %186 = vector.extract_strided_slice %32 {offsets = [6, 0, 0], sizes = [1, 15, 16], strides = [1, 1, 1]} : vector<8x15x16xf32> to vector<1x15x16xf32>
    %187 = vector.shape_cast %186 : vector<1x15x16xf32> to vector<15x16xf32>
    %188 = vector.shape_cast %187 : vector<15x16xf32> to vector<1x15x16xf32>
    %cst_37 = arith.constant dense<0.000000e+00> : vector<1xf32>
    %189 = vector.multi_reduction <add>, %188, %cst_37 [1, 2] : vector<1x15x16xf32> to vector<1xf32>
    %190 = vector.shape_cast %189 : vector<1xf32> to vector<1x1x1xf32>
    %191 = vector.extract %190[0, 0, 0] : f32 from vector<1x1x1xf32>
    %192 = arith.addf %185, %191 : f32
    %193 = vector.extract_strided_slice %7 {offsets = [7, 0, 0], sizes = [1, 16, 15], strides = [1, 1, 1]} : vector<8x16x15xf32> to vector<1x16x15xf32>
    %194 = vector.shape_cast %193 : vector<1x16x15xf32> to vector<16x15xf32>
    %195 = vector.shape_cast %194 : vector<16x15xf32> to vector<1x16x15xf32>
    %cst_38 = arith.constant dense<0.000000e+00> : vector<1xf32>
    %196 = vector.multi_reduction <add>, %195, %cst_38 [1, 2] : vector<1x16x15xf32> to vector<1xf32>
    %197 = vector.shape_cast %196 : vector<1xf32> to vector<1x1x1xf32>
    %198 = vector.extract %197[0, 0, 0] : f32 from vector<1x1x1xf32>
    %199 = vector.extract_strided_slice %32 {offsets = [7, 0, 0], sizes = [1, 15, 16], strides = [1, 1, 1]} : vector<8x15x16xf32> to vector<1x15x16xf32>
    %200 = vector.shape_cast %199 : vector<1x15x16xf32> to vector<15x16xf32>
    %201 = vector.shape_cast %200 : vector<15x16xf32> to vector<1x15x16xf32>
    %cst_39 = arith.constant dense<0.000000e+00> : vector<1xf32>
    %202 = vector.multi_reduction <add>, %201, %cst_39 [1, 2] : vector<1x15x16xf32> to vector<1xf32>
    %203 = vector.shape_cast %202 : vector<1xf32> to vector<1x1x1xf32>
    %204 = vector.extract %203[0, 0, 0] : f32 from vector<1x1x1xf32>
    %205 = arith.addf %198, %204 : f32
    %206 = vector.extract_strided_slice %28 {offsets = [0, 0, 0], sizes = [1, 16, 15], strides = [1, 1, 1]} : vector<8x16x15xf32> to vector<1x16x15xf32>
    %207 = vector.shape_cast %206 : vector<1x16x15xf32> to vector<16x15xf32>
    %208 = vector.shape_cast %207 : vector<16x15xf32> to vector<1x16x15xf32>
    %cst_40 = arith.constant dense<0.000000e+00> : vector<1xf32>
    %209 = vector.multi_reduction <add>, %208, %cst_40 [1, 2] : vector<1x16x15xf32> to vector<1xf32>
    %210 = vector.shape_cast %209 : vector<1xf32> to vector<1x1x1xf32>
    %211 = vector.extract %210[0, 0, 0] : f32 from vector<1x1x1xf32>
    %212 = vector.extract_strided_slice %53 {offsets = [0, 0, 0], sizes = [1, 15, 16], strides = [1, 1, 1]} : vector<8x15x16xf32> to vector<1x15x16xf32>
    %213 = vector.shape_cast %212 : vector<1x15x16xf32> to vector<15x16xf32>
    %214 = vector.shape_cast %213 : vector<15x16xf32> to vector<1x15x16xf32>
    %cst_41 = arith.constant dense<0.000000e+00> : vector<1xf32>
    %215 = vector.multi_reduction <add>, %214, %cst_41 [1, 2] : vector<1x15x16xf32> to vector<1xf32>
    %216 = vector.shape_cast %215 : vector<1xf32> to vector<1x1x1xf32>
    %217 = vector.extract %216[0, 0, 0] : f32 from vector<1x1x1xf32>
    %218 = arith.addf %211, %217 : f32
    %219 = vector.extract_strided_slice %28 {offsets = [1, 0, 0], sizes = [1, 16, 15], strides = [1, 1, 1]} : vector<8x16x15xf32> to vector<1x16x15xf32>
    %220 = vector.shape_cast %219 : vector<1x16x15xf32> to vector<16x15xf32>
    %221 = vector.shape_cast %220 : vector<16x15xf32> to vector<1x16x15xf32>
    %cst_42 = arith.constant dense<0.000000e+00> : vector<1xf32>
    %222 = vector.multi_reduction <add>, %221, %cst_42 [1, 2] : vector<1x16x15xf32> to vector<1xf32>
    %223 = vector.shape_cast %222 : vector<1xf32> to vector<1x1x1xf32>
    %224 = vector.extract %223[0, 0, 0] : f32 from vector<1x1x1xf32>
    %225 = vector.extract_strided_slice %53 {offsets = [1, 0, 0], sizes = [1, 15, 16], strides = [1, 1, 1]} : vector<8x15x16xf32> to vector<1x15x16xf32>
    %226 = vector.shape_cast %225 : vector<1x15x16xf32> to vector<15x16xf32>
    %227 = vector.shape_cast %226 : vector<15x16xf32> to vector<1x15x16xf32>
    %cst_43 = arith.constant dense<0.000000e+00> : vector<1xf32>
    %228 = vector.multi_reduction <add>, %227, %cst_43 [1, 2] : vector<1x15x16xf32> to vector<1xf32>
    %229 = vector.shape_cast %228 : vector<1xf32> to vector<1x1x1xf32>
    %230 = vector.extract %229[0, 0, 0] : f32 from vector<1x1x1xf32>
    %231 = arith.addf %224, %230 : f32
    %232 = vector.extract_strided_slice %28 {offsets = [2, 0, 0], sizes = [1, 16, 15], strides = [1, 1, 1]} : vector<8x16x15xf32> to vector<1x16x15xf32>
    %233 = vector.shape_cast %232 : vector<1x16x15xf32> to vector<16x15xf32>
    %234 = vector.shape_cast %233 : vector<16x15xf32> to vector<1x16x15xf32>
    %cst_44 = arith.constant dense<0.000000e+00> : vector<1xf32>
    %235 = vector.multi_reduction <add>, %234, %cst_44 [1, 2] : vector<1x16x15xf32> to vector<1xf32>
    %236 = vector.shape_cast %235 : vector<1xf32> to vector<1x1x1xf32>
    %237 = vector.extract %236[0, 0, 0] : f32 from vector<1x1x1xf32>
    %238 = vector.extract_strided_slice %53 {offsets = [2, 0, 0], sizes = [1, 15, 16], strides = [1, 1, 1]} : vector<8x15x16xf32> to vector<1x15x16xf32>
    %239 = vector.shape_cast %238 : vector<1x15x16xf32> to vector<15x16xf32>
    %240 = vector.shape_cast %239 : vector<15x16xf32> to vector<1x15x16xf32>
    %cst_45 = arith.constant dense<0.000000e+00> : vector<1xf32>
    %241 = vector.multi_reduction <add>, %240, %cst_45 [1, 2] : vector<1x15x16xf32> to vector<1xf32>
    %242 = vector.shape_cast %241 : vector<1xf32> to vector<1x1x1xf32>
    %243 = vector.extract %242[0, 0, 0] : f32 from vector<1x1x1xf32>
    %244 = arith.addf %237, %243 : f32
    %245 = vector.extract_strided_slice %28 {offsets = [3, 0, 0], sizes = [1, 16, 15], strides = [1, 1, 1]} : vector<8x16x15xf32> to vector<1x16x15xf32>
    %246 = vector.shape_cast %245 : vector<1x16x15xf32> to vector<16x15xf32>
    %247 = vector.shape_cast %246 : vector<16x15xf32> to vector<1x16x15xf32>
    %cst_46 = arith.constant dense<0.000000e+00> : vector<1xf32>
    %248 = vector.multi_reduction <add>, %247, %cst_46 [1, 2] : vector<1x16x15xf32> to vector<1xf32>
    %249 = vector.shape_cast %248 : vector<1xf32> to vector<1x1x1xf32>
    %250 = vector.extract %249[0, 0, 0] : f32 from vector<1x1x1xf32>
    %251 = vector.extract_strided_slice %53 {offsets = [3, 0, 0], sizes = [1, 15, 16], strides = [1, 1, 1]} : vector<8x15x16xf32> to vector<1x15x16xf32>
    %252 = vector.shape_cast %251 : vector<1x15x16xf32> to vector<15x16xf32>
    %253 = vector.shape_cast %252 : vector<15x16xf32> to vector<1x15x16xf32>
    %cst_47 = arith.constant dense<0.000000e+00> : vector<1xf32>
    %254 = vector.multi_reduction <add>, %253, %cst_47 [1, 2] : vector<1x15x16xf32> to vector<1xf32>
    %255 = vector.shape_cast %254 : vector<1xf32> to vector<1x1x1xf32>
    %256 = vector.extract %255[0, 0, 0] : f32 from vector<1x1x1xf32>
    %257 = arith.addf %250, %256 : f32
    %258 = vector.extract_strided_slice %28 {offsets = [4, 0, 0], sizes = [1, 16, 15], strides = [1, 1, 1]} : vector<8x16x15xf32> to vector<1x16x15xf32>
    %259 = vector.shape_cast %258 : vector<1x16x15xf32> to vector<16x15xf32>
    %260 = vector.shape_cast %259 : vector<16x15xf32> to vector<1x16x15xf32>
    %cst_48 = arith.constant dense<0.000000e+00> : vector<1xf32>
    %261 = vector.multi_reduction <add>, %260, %cst_48 [1, 2] : vector<1x16x15xf32> to vector<1xf32>
    %262 = vector.shape_cast %261 : vector<1xf32> to vector<1x1x1xf32>
    %263 = vector.extract %262[0, 0, 0] : f32 from vector<1x1x1xf32>
    %264 = vector.extract_strided_slice %53 {offsets = [4, 0, 0], sizes = [1, 15, 16], strides = [1, 1, 1]} : vector<8x15x16xf32> to vector<1x15x16xf32>
    %265 = vector.shape_cast %264 : vector<1x15x16xf32> to vector<15x16xf32>
    %266 = vector.shape_cast %265 : vector<15x16xf32> to vector<1x15x16xf32>
    %cst_49 = arith.constant dense<0.000000e+00> : vector<1xf32>
    %267 = vector.multi_reduction <add>, %266, %cst_49 [1, 2] : vector<1x15x16xf32> to vector<1xf32>
    %268 = vector.shape_cast %267 : vector<1xf32> to vector<1x1x1xf32>
    %269 = vector.extract %268[0, 0, 0] : f32 from vector<1x1x1xf32>
    %270 = arith.addf %263, %269 : f32
    %271 = vector.extract_strided_slice %28 {offsets = [5, 0, 0], sizes = [1, 16, 15], strides = [1, 1, 1]} : vector<8x16x15xf32> to vector<1x16x15xf32>
    %272 = vector.shape_cast %271 : vector<1x16x15xf32> to vector<16x15xf32>
    %273 = vector.shape_cast %272 : vector<16x15xf32> to vector<1x16x15xf32>
    %cst_50 = arith.constant dense<0.000000e+00> : vector<1xf32>
    %274 = vector.multi_reduction <add>, %273, %cst_50 [1, 2] : vector<1x16x15xf32> to vector<1xf32>
    %275 = vector.shape_cast %274 : vector<1xf32> to vector<1x1x1xf32>
    %276 = vector.extract %275[0, 0, 0] : f32 from vector<1x1x1xf32>
    %277 = vector.extract_strided_slice %53 {offsets = [5, 0, 0], sizes = [1, 15, 16], strides = [1, 1, 1]} : vector<8x15x16xf32> to vector<1x15x16xf32>
    %278 = vector.shape_cast %277 : vector<1x15x16xf32> to vector<15x16xf32>
    %279 = vector.shape_cast %278 : vector<15x16xf32> to vector<1x15x16xf32>
    %cst_51 = arith.constant dense<0.000000e+00> : vector<1xf32>
    %280 = vector.multi_reduction <add>, %279, %cst_51 [1, 2] : vector<1x15x16xf32> to vector<1xf32>
    %281 = vector.shape_cast %280 : vector<1xf32> to vector<1x1x1xf32>
    %282 = vector.extract %281[0, 0, 0] : f32 from vector<1x1x1xf32>
    %283 = arith.addf %276, %282 : f32
    %284 = vector.extract_strided_slice %28 {offsets = [6, 0, 0], sizes = [1, 16, 15], strides = [1, 1, 1]} : vector<8x16x15xf32> to vector<1x16x15xf32>
    %285 = vector.shape_cast %284 : vector<1x16x15xf32> to vector<16x15xf32>
    %286 = vector.shape_cast %285 : vector<16x15xf32> to vector<1x16x15xf32>
    %cst_52 = arith.constant dense<0.000000e+00> : vector<1xf32>
    %287 = vector.multi_reduction <add>, %286, %cst_52 [1, 2] : vector<1x16x15xf32> to vector<1xf32>
    %288 = vector.shape_cast %287 : vector<1xf32> to vector<1x1x1xf32>
    %289 = vector.extract %288[0, 0, 0] : f32 from vector<1x1x1xf32>
    %290 = vector.extract_strided_slice %53 {offsets = [6, 0, 0], sizes = [1, 15, 16], strides = [1, 1, 1]} : vector<8x15x16xf32> to vector<1x15x16xf32>
    %291 = vector.shape_cast %290 : vector<1x15x16xf32> to vector<15x16xf32>
    %292 = vector.shape_cast %291 : vector<15x16xf32> to vector<1x15x16xf32>
    %cst_53 = arith.constant dense<0.000000e+00> : vector<1xf32>
    %293 = vector.multi_reduction <add>, %292, %cst_53 [1, 2] : vector<1x15x16xf32> to vector<1xf32>
    %294 = vector.shape_cast %293 : vector<1xf32> to vector<1x1x1xf32>
    %295 = vector.extract %294[0, 0, 0] : f32 from vector<1x1x1xf32>
    %296 = arith.addf %289, %295 : f32
    %297 = vector.extract_strided_slice %28 {offsets = [7, 0, 0], sizes = [1, 16, 15], strides = [1, 1, 1]} : vector<8x16x15xf32> to vector<1x16x15xf32>
    %298 = vector.shape_cast %297 : vector<1x16x15xf32> to vector<16x15xf32>
    %299 = vector.shape_cast %298 : vector<16x15xf32> to vector<1x16x15xf32>
    %cst_54 = arith.constant dense<0.000000e+00> : vector<1xf32>
    %300 = vector.multi_reduction <add>, %299, %cst_54 [1, 2] : vector<1x16x15xf32> to vector<1xf32>
    %301 = vector.shape_cast %300 : vector<1xf32> to vector<1x1x1xf32>
    %302 = vector.extract %301[0, 0, 0] : f32 from vector<1x1x1xf32>
    %303 = vector.extract_strided_slice %53 {offsets = [7, 0, 0], sizes = [1, 15, 16], strides = [1, 1, 1]} : vector<8x15x16xf32> to vector<1x15x16xf32>
    %304 = vector.shape_cast %303 : vector<1x15x16xf32> to vector<15x16xf32>
    %305 = vector.shape_cast %304 : vector<15x16xf32> to vector<1x15x16xf32>
    %cst_55 = arith.constant dense<0.000000e+00> : vector<1xf32>
    %306 = vector.multi_reduction <add>, %305, %cst_55 [1, 2] : vector<1x15x16xf32> to vector<1xf32>
    %307 = vector.shape_cast %306 : vector<1xf32> to vector<1x1x1xf32>
    %308 = vector.extract %307[0, 0, 0] : f32 from vector<1x1x1xf32>
    %309 = arith.addf %302, %308 : f32
    %c0_i32_56 = arith.constant 0 : i32
    %310 = arith.cmpi eq, %arg1, %c0_i32_56 : i32
    %311 = arith.extui %310 : i1 to i32
    %c0_i32_57 = arith.constant 0 : i32
    %312 = arith.cmpi ne, %311, %c0_i32_57 : i32
    scf.if %312 {
      %c0_58 = arith.constant 0 : index
      %c0_59 = arith.constant 0 : index
      %313 = memref.load %arg4[%c0_58, %c0_59] : memref<1x8xf32, #tpu.memory_space<smem>>
      memref.store %59, %arg4[%c0_58, %c0_59] : memref<1x8xf32, #tpu.memory_space<smem>>
      %c0_60 = arith.constant 0 : index
      %c0_61 = arith.constant 0 : index
      %314 = memref.load %arg6[%c0_60, %c0_61] : memref<1x8xf32, #tpu.memory_space<smem>>
      memref.store %114, %arg6[%c0_60, %c0_61] : memref<1x8xf32, #tpu.memory_space<smem>>
      %c0_62 = arith.constant 0 : index
      %c0_63 = arith.constant 0 : index
      %315 = memref.load %arg5[%c0_62, %c0_63] : memref<1x8xf32, #tpu.memory_space<smem>>
      memref.store %218, %arg5[%c0_62, %c0_63] : memref<1x8xf32, #tpu.memory_space<smem>>
      %c0_64 = arith.constant 0 : index
      %c1 = arith.constant 1 : index
      %316 = memref.load %arg4[%c0_64, %c1] : memref<1x8xf32, #tpu.memory_space<smem>>
      memref.store %65, %arg4[%c0_64, %c1] : memref<1x8xf32, #tpu.memory_space<smem>>
      %c0_65 = arith.constant 0 : index
      %c1_66 = arith.constant 1 : index
      %317 = memref.load %arg6[%c0_65, %c1_66] : memref<1x8xf32, #tpu.memory_space<smem>>
      memref.store %127, %arg6[%c0_65, %c1_66] : memref<1x8xf32, #tpu.memory_space<smem>>
      %c0_67 = arith.constant 0 : index
      %c1_68 = arith.constant 1 : index
      %318 = memref.load %arg5[%c0_67, %c1_68] : memref<1x8xf32, #tpu.memory_space<smem>>
      memref.store %231, %arg5[%c0_67, %c1_68] : memref<1x8xf32, #tpu.memory_space<smem>>
      %c0_69 = arith.constant 0 : index
      %c2 = arith.constant 2 : index
      %319 = memref.load %arg4[%c0_69, %c2] : memref<1x8xf32, #tpu.memory_space<smem>>
      memref.store %71, %arg4[%c0_69, %c2] : memref<1x8xf32, #tpu.memory_space<smem>>
      %c0_70 = arith.constant 0 : index
      %c2_71 = arith.constant 2 : index
      %320 = memref.load %arg6[%c0_70, %c2_71] : memref<1x8xf32, #tpu.memory_space<smem>>
      memref.store %140, %arg6[%c0_70, %c2_71] : memref<1x8xf32, #tpu.memory_space<smem>>
      %c0_72 = arith.constant 0 : index
      %c2_73 = arith.constant 2 : index
      %321 = memref.load %arg5[%c0_72, %c2_73] : memref<1x8xf32, #tpu.memory_space<smem>>
      memref.store %244, %arg5[%c0_72, %c2_73] : memref<1x8xf32, #tpu.memory_space<smem>>
      %c0_74 = arith.constant 0 : index
      %c3 = arith.constant 3 : index
      %322 = memref.load %arg4[%c0_74, %c3] : memref<1x8xf32, #tpu.memory_space<smem>>
      memref.store %77, %arg4[%c0_74, %c3] : memref<1x8xf32, #tpu.memory_space<smem>>
      %c0_75 = arith.constant 0 : index
      %c3_76 = arith.constant 3 : index
      %323 = memref.load %arg6[%c0_75, %c3_76] : memref<1x8xf32, #tpu.memory_space<smem>>
      memref.store %153, %arg6[%c0_75, %c3_76] : memref<1x8xf32, #tpu.memory_space<smem>>
      %c0_77 = arith.constant 0 : index
      %c3_78 = arith.constant 3 : index
      %324 = memref.load %arg5[%c0_77, %c3_78] : memref<1x8xf32, #tpu.memory_space<smem>>
      memref.store %257, %arg5[%c0_77, %c3_78] : memref<1x8xf32, #tpu.memory_space<smem>>
      %c0_79 = arith.constant 0 : index
      %c4 = arith.constant 4 : index
      %325 = memref.load %arg4[%c0_79, %c4] : memref<1x8xf32, #tpu.memory_space<smem>>
      memref.store %83, %arg4[%c0_79, %c4] : memref<1x8xf32, #tpu.memory_space<smem>>
      %c0_80 = arith.constant 0 : index
      %c4_81 = arith.constant 4 : index
      %326 = memref.load %arg6[%c0_80, %c4_81] : memref<1x8xf32, #tpu.memory_space<smem>>
      memref.store %166, %arg6[%c0_80, %c4_81] : memref<1x8xf32, #tpu.memory_space<smem>>
      %c0_82 = arith.constant 0 : index
      %c4_83 = arith.constant 4 : index
      %327 = memref.load %arg5[%c0_82, %c4_83] : memref<1x8xf32, #tpu.memory_space<smem>>
      memref.store %270, %arg5[%c0_82, %c4_83] : memref<1x8xf32, #tpu.memory_space<smem>>
      %c0_84 = arith.constant 0 : index
      %c5 = arith.constant 5 : index
      %328 = memref.load %arg4[%c0_84, %c5] : memref<1x8xf32, #tpu.memory_space<smem>>
      memref.store %89, %arg4[%c0_84, %c5] : memref<1x8xf32, #tpu.memory_space<smem>>
      %c0_85 = arith.constant 0 : index
      %c5_86 = arith.constant 5 : index
      %329 = memref.load %arg6[%c0_85, %c5_86] : memref<1x8xf32, #tpu.memory_space<smem>>
      memref.store %179, %arg6[%c0_85, %c5_86] : memref<1x8xf32, #tpu.memory_space<smem>>
      %c0_87 = arith.constant 0 : index
      %c5_88 = arith.constant 5 : index
      %330 = memref.load %arg5[%c0_87, %c5_88] : memref<1x8xf32, #tpu.memory_space<smem>>
      memref.store %283, %arg5[%c0_87, %c5_88] : memref<1x8xf32, #tpu.memory_space<smem>>
      %c0_89 = arith.constant 0 : index
      %c6 = arith.constant 6 : index
      %331 = memref.load %arg4[%c0_89, %c6] : memref<1x8xf32, #tpu.memory_space<smem>>
      memref.store %95, %arg4[%c0_89, %c6] : memref<1x8xf32, #tpu.memory_space<smem>>
      %c0_90 = arith.constant 0 : index
      %c6_91 = arith.constant 6 : index
      %332 = memref.load %arg6[%c0_90, %c6_91] : memref<1x8xf32, #tpu.memory_space<smem>>
      memref.store %192, %arg6[%c0_90, %c6_91] : memref<1x8xf32, #tpu.memory_space<smem>>
      %c0_92 = arith.constant 0 : index
      %c6_93 = arith.constant 6 : index
      %333 = memref.load %arg5[%c0_92, %c6_93] : memref<1x8xf32, #tpu.memory_space<smem>>
      memref.store %296, %arg5[%c0_92, %c6_93] : memref<1x8xf32, #tpu.memory_space<smem>>
      %c0_94 = arith.constant 0 : index
      %c7 = arith.constant 7 : index
      %334 = memref.load %arg4[%c0_94, %c7] : memref<1x8xf32, #tpu.memory_space<smem>>
      memref.store %101, %arg4[%c0_94, %c7] : memref<1x8xf32, #tpu.memory_space<smem>>
      %c0_95 = arith.constant 0 : index
      %c7_96 = arith.constant 7 : index
      %335 = memref.load %arg6[%c0_95, %c7_96] : memref<1x8xf32, #tpu.memory_space<smem>>
      memref.store %205, %arg6[%c0_95, %c7_96] : memref<1x8xf32, #tpu.memory_space<smem>>
      %c0_97 = arith.constant 0 : index
      %c7_98 = arith.constant 7 : index
      %336 = memref.load %arg5[%c0_97, %c7_98] : memref<1x8xf32, #tpu.memory_space<smem>>
      memref.store %309, %arg5[%c0_97, %c7_98] : memref<1x8xf32, #tpu.memory_space<smem>>
    } else {
    }
    return
  }
  func.func @transform_0(%arg0: i32, %arg1: i32) -> (i32, i32, i32) {
    %c0_i32 = arith.constant 0 : i32
    %c0_i32_0 = arith.constant 0 : i32
    return %arg0, %arg1, %c0_i32 : i32, i32, i32
  }
  func.func @transform_1(%arg0: i32, %arg1: i32) -> (i32, i32, i32) {
    %c0_i32 = arith.constant 0 : i32
    %c0_i32_0 = arith.constant 0 : i32
    return %arg0, %arg1, %c0_i32 : i32, i32, i32
  }
  func.func @transform_2(%arg0: i32, %arg1: i32) -> (i32, i32) {
    %c0_i32 = arith.constant 0 : i32
    %c0_i32_0 = arith.constant 0 : i32
    return %arg0, %c0_i32 : i32, i32
  }
  func.func @transform_3(%arg0: i32, %arg1: i32) -> (i32, i32) {
    %c0_i32 = arith.constant 0 : i32
    %c0_i32_0 = arith.constant 0 : i32
    return %arg0, %c0_i32 : i32, i32
  }
  func.func @transform_4(%arg0: i32, %arg1: i32) -> (i32, i32) {
    %c0_i32 = arith.constant 0 : i32
    %c0_i32_0 = arith.constant 0 : i32
    return %arg0, %c0_i32 : i32, i32
  }
}

</mosaic_0001>

<llo_original>
// kernel: tpu_custom_call.1
$region0: #{tpu_custom_call.1}
  #allocation0 [shape = 'u32[]', space=smem, size = 0x4, offset = 0x4, fixed_abs, tag = 'smem constant byte address 0x4 - core index']
  #allocation1 [shape = 'u32[72,128]{1,0:T(1,128)}', space=vmem, size = 0x9000, scoped, tag = 'internal scratch']
  #allocation2 [shape = 'f32[8,1,16]{2,1,0:T(1,128)}', space=vmem, size = 0x1000, scoped, tag = 'scratch operand']
  %s0 = inlined_call_operand.hbm [shape: f32[8,16,16], index: 0, kind: input, shape index: {}]
  %s1 = inlined_call_operand.hbm [shape: f32[8,16,16], index: 1, kind: input, shape index: {}]
  %s2 = inlined_call_operand.hbm [shape: f32[1,8], index: 2, kind: output, shape index: {0}]
  %s3 = inlined_call_operand.hbm [shape: f32[1,8], index: 3, kind: output, shape index: {1}]
  %s4 = inlined_call_operand.hbm [shape: f32[1,8], index: 4, kind: output, shape index: {2}]
  %5 = xla_tuple %s2, %s3, %s4
  %s6 = sld [smem:[#allocation0]]
  $region46: #{tpu_custom_call.1} parent=0
    _
  %s8 = ssub.s32 1, %s6
  %s9 = scalar_select 0, %s8, %s6
  $region1: #{tpu_custom_call.1} parent=0
    #allocation3 [shape = 'u8[65536]{0}', space=vmem, size = 0x10000, scoped, tag = 'input window, operand 0, single buffered']
    #allocation4 [shape = 's32[1]{0}', space=sflag, size = 0x4, scoped, tag = 'scoped memory for tpu_custom_call.1']
    #allocation5 [shape = 's32[1]{0}', space=sflag, size = 0x4, scoped, tag = 'scoped memory for tpu_custom_call.1']
    #allocation6 [shape = 'u8[65536]{0}', space=vmem, size = 0x10000, scoped, tag = 'input window, operand 1, single buffered']
    #allocation7 [shape = 's32[1]{0}', space=sflag, size = 0x4, scoped, tag = 'scoped memory for tpu_custom_call.1']
    #allocation8 [shape = 'u8[512]{0}', space=smem, size = 0x200, scoped, tag = 'output window, operand 0, single buffered']
    #allocation9 [shape = 'u8[512]{0}', space=smem, size = 0x200, scoped, tag = 'output window, operand 1, single buffered']
    #allocation10 [shape = 's32[1]{0}', space=sflag, size = 0x4, scoped, tag = 'scoped memory for tpu_custom_call.1']
    #allocation11 [shape = 'u8[512]{0}', space=smem, size = 0x200, scoped, tag = 'output window, operand 2, single buffered']
    %10 = vsyncpa [#allocation4], 0
    %11 = vsyncpa [#allocation7], 0
    %12 = vsyncpa [#allocation5], 0
    %13 = vsyncpa [#allocation10], 0
    // Predicated region
    $region2: #{tpu_custom_call.1} parent=1 // pred_check
      _
    $region3: #{tpu_custom_call.1} parent=1 // pred_check_branch
      %15 = sbr.rel (0) target = $region5
    $region4: #{tpu_custom_call.1} parent=1 // pred_region
      %17 = vsyncadd [#allocation4], 0
      %s18 = sshll.u32 %s0, 4
      %s19 = int_to_ptr.hbm [resolvable:$true] %s18
      %s20 = sshll.u32 [#allocation3], 4
      %s21 = int_to_ptr.vmem [resolvable:$true] %s20
      %26 = dma.hbm_to_vmem [thread:$0]  %s19, 2048, %s21, [#allocation4], 128, 128, 8
    $region5: #{tpu_custom_call.1} parent=1 // pred_fallthru
      _
    // Predicated region
    $region6: #{tpu_custom_call.1} parent=1 // pred_check
      _
    $region7: #{tpu_custom_call.1} parent=1 // pred_check_branch
      %28 = sbr.rel (0) target = $region9
    $region8: #{tpu_custom_call.1} parent=1 // pred_region
      %30 = vsyncadd [#allocation7], 0
      %s31 = sshll.u32 %s1, 4
      %s32 = int_to_ptr.hbm [resolvable:$true] %s31
      %s33 = sshll.u32 [#allocation6], 4
      %s34 = int_to_ptr.vmem [resolvable:$true] %s33
      %39 = dma.hbm_to_vmem [thread:$0]  %s32, 2048, %s34, [#allocation7], 128, 128, 8
    $region9: #{tpu_custom_call.1} parent=1 // pred_fallthru
      _
    // Predicated region
    $region10: #{tpu_custom_call.1} parent=1 // pred_check
      _
    $region11: #{tpu_custom_call.1} parent=1 // pred_check_branch
      %41 = sbr.rel (0) target = $region13
    $region12: #{tpu_custom_call.1} parent=1 // pred_region
      %43 = dma.done [#allocation4], 2048
    $region13: #{tpu_custom_call.1} parent=1 // pred_fallthru
      _
    // Predicated region
    $region14: #{tpu_custom_call.1} parent=1 // pred_check
      _
    $region15: #{tpu_custom_call.1} parent=1 // pred_check_branch
      %45 = sbr.rel (0) target = $region17
    $region16: #{tpu_custom_call.1} parent=1 // pred_region
      %47 = dma.done [#allocation7], 2048
    $region17: #{tpu_custom_call.1} parent=1 // pred_fallthru
      _
    %v48 = vld [vmem:[#allocation3] sm:$0xff]
    %v49 = vld [vmem:[#allocation3 + $0x8] sm:$0xff]
    %v50 = vld [vmem:[#allocation3 + $0x10] sm:$0xff]
    %v51 = vld [vmem:[#allocation3 + $0x18] sm:$0xff]
    %v52 = vld [vmem:[#allocation3 + $0x20] sm:$0xff]
    %v53 = vld [vmem:[#allocation3 + $0x28] sm:$0xff]
    %v54 = vld [vmem:[#allocation3 + $0x30] sm:$0xff]
    %v55 = vld [vmem:[#allocation3 + $0x38] sm:$0xff]
    %v56 = vld [vmem:[#allocation3 + $0x40] sm:$0xff]
    %v57 = vld [vmem:[#allocation3 + $0x48] sm:$0xff]
    %v58 = vld [vmem:[#allocation3 + $0x50] sm:$0xff]
    %v59 = vld [vmem:[#allocation3 + $0x58] sm:$0xff]
    %v60 = vld [vmem:[#allocation3 + $0x60] sm:$0xff]
    %v61 = vld [vmem:[#allocation3 + $0x68] sm:$0xff]
    %v62 = vld [vmem:[#allocation3 + $0x70] sm:$0xff]
    %v63 = vld [vmem:[#allocation3 + $0x78] sm:$0xff]
    %v64 = vld [vmem:[#allocation6] sm:$0xff]
    %v65 = vld [vmem:[#allocation6 + $0x8] sm:$0xff]
    %v66 = vld [vmem:[#allocation6 + $0x10] sm:$0xff]
    %v67 = vld [vmem:[#allocation6 + $0x18] sm:$0xff]
    %v68 = vld [vmem:[#allocation6 + $0x20] sm:$0xff]
    %v69 = vld [vmem:[#allocation6 + $0x28] sm:$0xff]
    %v70 = vld [vmem:[#allocation6 + $0x30] sm:$0xff]
    %v71 = vld [vmem:[#allocation6 + $0x38] sm:$0xff]
    %v72 = vld [vmem:[#allocation6 + $0x40] sm:$0xff]
    %v73 = vld [vmem:[#allocation6 + $0x48] sm:$0xff]
    %v74 = vld [vmem:[#allocation6 + $0x50] sm:$0xff]
    %v75 = vld [vmem:[#allocation6 + $0x58] sm:$0xff]
    %v76 = vld [vmem:[#allocation6 + $0x60] sm:$0xff]
    %v77 = vld [vmem:[#allocation6 + $0x68] sm:$0xff]
    %v78 = vld [vmem:[#allocation6 + $0x70] sm:$0xff]
    %v79 = vld [vmem:[#allocation6 + $0x78] sm:$0xff]
    %v80 = vsub.f32 %v48, %v64
    %v81 = vsub.f32 %v49, %v65
    %v82 = vsub.f32 %v50, %v66
    %v83 = vsub.f32 %v51, %v67
    %v84 = vsub.f32 %v52, %v68
    %v85 = vsub.f32 %v53, %v69
    %v86 = vsub.f32 %v54, %v70
    %v87 = vsub.f32 %v55, %v71
    %v88 = vsub.f32 %v56, %v72
    %v89 = vsub.f32 %v57, %v73
    %v90 = vsub.f32 %v58, %v74
    %v91 = vsub.f32 %v59, %v75
    %v92 = vsub.f32 %v60, %v76
    %v93 = vsub.f32 %v61, %v77
    %v94 = vsub.f32 %v62, %v78
    %v95 = vsub.f32 %v63, %v79
    %v96 = vmul.f32 %v80, %v80
    %v97 = vmul.f32 %v81, %v81
    %v98 = vmul.f32 %v82, %v82
    %v99 = vmul.f32 %v83, %v83
    %v100 = vmul.f32 %v84, %v84
    %v101 = vmul.f32 %v85, %v85
    %v102 = vmul.f32 %v86, %v86
    %v103 = vmul.f32 %v87, %v87
    %v104 = vmul.f32 %v88, %v88
    %v105 = vmul.f32 %v89, %v89
    %v106 = vmul.f32 %v90, %v90
    %v107 = vmul.f32 %v91, %v91
    %v108 = vmul.f32 %v92, %v92
    %v109 = vmul.f32 %v93, %v93
    %v110 = vmul.f32 %v94, %v94
    %v111 = vmul.f32 %v95, %v95
    %128 = vrot.lane.b32.xlu0 %v48, 127
    %v129 = vpop.permute.xlu0 %128
    %130 = vrot.lane.b32.xlu0 %v49, 127
    %v131 = vpop.permute.xlu0 %130
    %132 = vrot.lane.b32.xlu0 %v50, 127
    %v133 = vpop.permute.xlu0 %132
    %134 = vrot.lane.b32.xlu0 %v51, 127
    %v135 = vpop.permute.xlu0 %134
    %136 = vrot.lane.b32.xlu0 %v52, 127
    %v137 = vpop.permute.xlu0 %136
    %138 = vrot.lane.b32.xlu0 %v53, 127
    %v139 = vpop.permute.xlu0 %138
    %140 = vrot.lane.b32.xlu0 %v54, 127
    %v141 = vpop.permute.xlu0 %140
    %142 = vrot.lane.b32.xlu0 %v55, 127
    %v143 = vpop.permute.xlu0 %142
    %144 = vrot.lane.b32.xlu0 %v56, 127
    %v145 = vpop.permute.xlu0 %144
    %146 = vrot.lane.b32.xlu0 %v57, 127
    %v147 = vpop.permute.xlu0 %146
    %148 = vrot.lane.b32.xlu0 %v58, 127
    %v149 = vpop.permute.xlu0 %148
    %150 = vrot.lane.b32.xlu0 %v59, 127
    %v151 = vpop.permute.xlu0 %150
    %152 = vrot.lane.b32.xlu0 %v60, 127
    %v153 = vpop.permute.xlu0 %152
    %154 = vrot.lane.b32.xlu0 %v61, 127
    %v155 = vpop.permute.xlu0 %154
    %156 = vrot.lane.b32.xlu0 %v62, 127
    %v157 = vpop.permute.xlu0 %156
    %158 = vrot.lane.b32.xlu0 %v63, 127
    %v159 = vpop.permute.xlu0 %158
    %v176 = vsub.f32 %v48, %v129
    %v177 = vsub.f32 %v49, %v131
    %v178 = vsub.f32 %v50, %v133
    %v179 = vsub.f32 %v51, %v135
    %v180 = vsub.f32 %v52, %v137
    %v181 = vsub.f32 %v53, %v139
    %v182 = vsub.f32 %v54, %v141
    %v183 = vsub.f32 %v55, %v143
    %v184 = vsub.f32 %v56, %v145
    %v185 = vsub.f32 %v57, %v147
    %v186 = vsub.f32 %v58, %v149
    %v187 = vsub.f32 %v59, %v151
    %v188 = vsub.f32 %v60, %v153
    %v189 = vsub.f32 %v61, %v155
    %v190 = vsub.f32 %v62, %v157
    %v191 = vsub.f32 %v63, %v159
    %v192 = vmul.f32 %v176, %v176
    %v193 = vmul.f32 %v177, %v177
    %v194 = vmul.f32 %v178, %v178
    %v195 = vmul.f32 %v179, %v179
    %v196 = vmul.f32 %v180, %v180
    %v197 = vmul.f32 %v181, %v181
    %v198 = vmul.f32 %v182, %v182
    %v199 = vmul.f32 %v183, %v183
    %v200 = vmul.f32 %v184, %v184
    %v201 = vmul.f32 %v185, %v185
    %v202 = vmul.f32 %v186, %v186
    %v203 = vmul.f32 %v187, %v187
    %v204 = vmul.f32 %v188, %v188
    %v205 = vmul.f32 %v189, %v189
    %v206 = vmul.f32 %v190, %v190
    %v207 = vmul.f32 %v191, %v191
    %v208 = vlaneseq
    %v209 = vand.u32 %v208, 127
    %vm210 = vcmp.lt.s32.totalorder %v209, 0
    %v211 = vsub.s32 0, %v209
    %v212 = vsel %vm210, %v211, %v209
    %v213 = vshrl.u32 %v212, 3
    %v214 = vand.u32 %v212, 7
    %v215 = vsub.s32 0, %v214
    %v216 = vsel %vm210, %v215, %v214
    %vm217 = vcmp.ne.s32.totalorder %v216, 0
    %vm218 = vcmp.lt.s32.totalorder %v216, 0
    %vm219 = vmand %vm218, %vm217
    %v220 = vadd.s32 %v216, 8
    %v221 = vsel %vm219, %v220, %v216
    %vm222 = vcmp.eq.s32.totalorder %v221, 7
    %v223 = vsel %vm222, %v192, 0.0
    %v224 = vsel %vm222, %v193, 0.0
    %v225 = vsel %vm222, %v194, 0.0
    %v226 = vsel %vm222, %v195, 0.0
    %v227 = vsel %vm222, %v196, 0.0
    %v228 = vsel %vm222, %v197, 0.0
    %v229 = vsel %vm222, %v198, 0.0
    %v230 = vsel %vm222, %v199, 0.0
    %v231 = vsel %vm222, %v200, 0.0
    %v232 = vsel %vm222, %v201, 0.0
    %v233 = vsel %vm222, %v202, 0.0
    %v234 = vsel %vm222, %v203, 0.0
    %v235 = vsel %vm222, %v204, 0.0
    %v236 = vsel %vm222, %v205, 0.0
    %v237 = vsel %vm222, %v206, 0.0
    %v238 = vsel %vm222, %v207, 0.0
    %vm239 = vcmask 1046528
    %v240 = vrot.slane %v48, 1
    %v241 = vrot.slane %v49, 1
    %v242 = vsel %vm239, %v240, %v241
    %v243 = vrot.slane %v50, 1
    %v244 = vrot.slane %v51, 1
    %v245 = vsel %vm239, %v243, %v244
    %v246 = vrot.slane %v52, 1
    %v247 = vrot.slane %v53, 1
    %v248 = vsel %vm239, %v246, %v247
    %v249 = vrot.slane %v54, 1
    %v250 = vrot.slane %v55, 1
    %v251 = vsel %vm239, %v249, %v250
    %v252 = vrot.slane %v56, 1
    %v253 = vrot.slane %v57, 1
    %v254 = vsel %vm239, %v252, %v253
    %v255 = vrot.slane %v58, 1
    %v256 = vrot.slane %v59, 1
    %v257 = vsel %vm239, %v255, %v256
    %v258 = vrot.slane %v60, 1
    %v259 = vrot.slane %v61, 1
    %v260 = vsel %vm239, %v258, %v259
    %v261 = vrot.slane %v62, 1
    %v262 = vrot.slane %v63, 1
    %v263 = vsel %vm239, %v261, %v262
    %v280 = vsub.f32 %v48, %v242
    %v281 = vsub.f32 %v49, %v241
    %v282 = vsub.f32 %v50, %v245
    %v283 = vsub.f32 %v51, %v244
    %v284 = vsub.f32 %v52, %v248
    %v285 = vsub.f32 %v53, %v247
    %v286 = vsub.f32 %v54, %v251
    %v287 = vsub.f32 %v55, %v250
    %v288 = vsub.f32 %v56, %v254
    %v289 = vsub.f32 %v57, %v253
    %v290 = vsub.f32 %v58, %v257
    %v291 = vsub.f32 %v59, %v256
    %v292 = vsub.f32 %v60, %v260
    %v293 = vsub.f32 %v61, %v259
    %v294 = vsub.f32 %v62, %v263
    %v295 = vsub.f32 %v63, %v262
    %v296 = vmul.f32 %v280, %v280
    %v297 = vmul.f32 %v281, %v281
    %v298 = vmul.f32 %v282, %v282
    %v299 = vmul.f32 %v283, %v283
    %v300 = vmul.f32 %v284, %v284
    %v301 = vmul.f32 %v285, %v285
    %v302 = vmul.f32 %v286, %v286
    %v303 = vmul.f32 %v287, %v287
    %v304 = vmul.f32 %v288, %v288
    %v305 = vmul.f32 %v289, %v289
    %v306 = vmul.f32 %v290, %v290
    %v307 = vmul.f32 %v291, %v291
    %v308 = vmul.f32 %v292, %v292
    %v309 = vmul.f32 %v293, %v293
    %v310 = vmul.f32 %v294, %v294
    %v311 = vmul.f32 %v295, %v295
    %v312 = vlaneseq
    %v313 = vshrl.u32 %v312, 7
    %v314 = vadd.s32 %v313, 8
    %vm315 = vcmp.lt.s32.totalorder %v313, 0
    %v316 = vsub.s32 0, %v313
    %v317 = vsel %vm315, %v316, %v313
    %v318 = vshrl.u32 %v317, 3
    %v319 = vand.u32 %v317, 7
    %v320 = vsub.s32 0, %v319
    %v321 = vsel %vm315, %v320, %v319
    %vm322 = vcmp.lt.s32.totalorder %v314, 0
    %v323 = vsub.s32 0, %v314
    %v324 = vsel %vm322, %v323, %v314
    %v325 = vshrl.u32 %v324, 3
    %v326 = vand.u32 %v324, 7
    %v327 = vsub.s32 0, %v326
    %v328 = vsel %vm322, %v327, %v326
    %vm329 = vcmp.ne.s32.totalorder %v321, 0
    %vm330 = vcmp.ne.s32.totalorder %v328, 0
    %vm331 = vcmp.lt.s32.totalorder %v321, 0
    %vm332 = vcmp.lt.s32.totalorder %v328, 0
    %vm333 = vmand %vm331, %vm329
    %vm334 = vmand %vm332, %vm330
    %v335 = vadd.s32 %v321, 8
    %v336 = vadd.s32 %v328, 8
    %v337 = vsel %vm333, %v335, %v321
    %v338 = vsel %vm334, %v336, %v328
    %vm339 = vcmp.eq.s32.totalorder %v337, 7
    %vm340 = vcmp.eq.s32.totalorder %v338, 7
    %v341 = vsel %vm339, %v296, 0.0
    %v342 = vsel %vm340, %v297, 0.0
    %v343 = vsel %vm339, %v298, 0.0
    %v344 = vsel %vm340, %v299, 0.0
    %v345 = vsel %vm339, %v300, 0.0
    %v346 = vsel %vm340, %v301, 0.0
    %v347 = vsel %vm339, %v302, 0.0
    %v348 = vsel %vm340, %v303, 0.0
    %v349 = vsel %vm339, %v304, 0.0
    %v350 = vsel %vm340, %v305, 0.0
    %v351 = vsel %vm339, %v306, 0.0
    %v352 = vsel %vm340, %v307, 0.0
    %v353 = vsel %vm339, %v308, 0.0
    %v354 = vsel %vm340, %v309, 0.0
    %v355 = vsel %vm339, %v310, 0.0
    %v356 = vsel %vm340, %v311, 0.0
    %vm357 = vcmask 130048
    %v358 = vsel %vm357, %v96, 0.0
    %v359 = vsel %vm357, %v97, 0.0
    %v360 = vadd.f32 %v358, %v359
    %361 = vadd.xlane.f32.xlu0 %v360
    %v362 = vpop.xlane.xlu0 %361
    %v363 = vrot.slane %v362, 4
    %v364 = vadd.f32 %v362, %v363
    %v365 = vrot.slane %v364, 2
    %v366 = vadd.f32 %v364, %v365
    %v367 = vrot.slane %v366, 1
    %v368 = vadd.f32 %v366, %v367
    %s369 = vtos %v368
    %v370 = vsel %vm357, %v98, 0.0
    %v371 = vsel %vm357, %v99, 0.0
    %v372 = vadd.f32 %v370, %v371
    %373 = vadd.xlane.f32.xlu0 %v372
    %v374 = vpop.xlane.xlu0 %373
    %v375 = vrot.slane %v374, 4
    %v376 = vadd.f32 %v374, %v375
    %v377 = vrot.slane %v376, 2
    %v378 = vadd.f32 %v376, %v377
    %v379 = vrot.slane %v378, 1
    %v380 = vadd.f32 %v378, %v379
    %s381 = vtos %v380
    %v382 = vsel %vm357, %v100, 0.0
    %v383 = vsel %vm357, %v101, 0.0
    %v384 = vadd.f32 %v382, %v383
    %385 = vadd.xlane.f32.xlu0 %v384
    %v386 = vpop.xlane.xlu0 %385
    %v387 = vrot.slane %v386, 4
    %v388 = vadd.f32 %v386, %v387
    %v389 = vrot.slane %v388, 2
    %v390 = vadd.f32 %v388, %v389
    %v391 = vrot.slane %v390, 1
    %v392 = vadd.f32 %v390, %v391
    %s393 = vtos %v392
    %v394 = vsel %vm357, %v102, 0.0
    %v395 = vsel %vm357, %v103, 0.0
    %v396 = vadd.f32 %v394, %v395
    %397 = vadd.xlane.f32.xlu0 %v396
    %v398 = vpop.xlane.xlu0 %397
    %v399 = vrot.slane %v398, 4
    %v400 = vadd.f32 %v398, %v399
    %v401 = vrot.slane %v400, 2
    %v402 = vadd.f32 %v400, %v401
    %v403 = vrot.slane %v402, 1
    %v404 = vadd.f32 %v402, %v403
    %s405 = vtos %v404
    %v406 = vsel %vm357, %v104, 0.0
    %v407 = vsel %vm357, %v105, 0.0
    %v408 = vadd.f32 %v406, %v407
    %409 = vadd.xlane.f32.xlu0 %v408
    %v410 = vpop.xlane.xlu0 %409
    %v411 = vrot.slane %v410, 4
    %v412 = vadd.f32 %v410, %v411
    %v413 = vrot.slane %v412, 2
    %v414 = vadd.f32 %v412, %v413
    %v415 = vrot.slane %v414, 1
    %v416 = vadd.f32 %v414, %v415
    %s417 = vtos %v416
    %v418 = vsel %vm357, %v106, 0.0
    %v419 = vsel %vm357, %v107, 0.0
    %v420 = vadd.f32 %v418, %v419
    %421 = vadd.xlane.f32.xlu0 %v420
    %v422 = vpop.xlane.xlu0 %421
    %v423 = vrot.slane %v422, 4
    %v424 = vadd.f32 %v422, %v423
    %v425 = vrot.slane %v424, 2
    %v426 = vadd.f32 %v424, %v425
    %v427 = vrot.slane %v426, 1
    %v428 = vadd.f32 %v426, %v427
    %s429 = vtos %v428
    %v430 = vsel %vm357, %v108, 0.0
    %v431 = vsel %vm357, %v109, 0.0
    %v432 = vadd.f32 %v430, %v431
    %433 = vadd.xlane.f32.xlu0 %v432
    %v434 = vpop.xlane.xlu0 %433
    %v435 = vrot.slane %v434, 4
    %v436 = vadd.f32 %v434, %v435
    %v437 = vrot.slane %v436, 2
    %v438 = vadd.f32 %v436, %v437
    %v439 = vrot.slane %v438, 1
    %v440 = vadd.f32 %v438, %v439
    %s441 = vtos %v440
    %v442 = vsel %vm357, %v110, 0.0
    %v443 = vsel %vm357, %v111, 0.0
    %v444 = vadd.f32 %v442, %v443
    %445 = vadd.xlane.f32.xlu0 %v444
    %v446 = vpop.xlane.xlu0 %445
    %v447 = vrot.slane %v446, 4
    %v448 = vadd.f32 %v446, %v447
    %v449 = vrot.slane %v448, 2
    %v450 = vadd.f32 %v448, %v449
    %v451 = vrot.slane %v450, 1
    %v452 = vadd.f32 %v450, %v451
    %s453 = vtos %v452
    %vm454 = vcmask 121856
    %v455 = vsel %vm454, %v192, 0.0
    %v456 = vsel %vm454, %v193, 0.0
    %v457 = vadd.f32 %v455, %v456
    %458 = vadd.xlane.f32.xlu0 %v457
    %v459 = vpop.xlane.xlu0 %458
    %v460 = vrot.slane %v459, 4
    %v461 = vadd.f32 %v459, %v460
    %v462 = vrot.slane %v461, 2
    %v463 = vadd.f32 %v461, %v462
    %v464 = vrot.slane %v463, 1
    %v465 = vadd.f32 %v463, %v464
    %s466 = vtos %v465
    %v467 = vsel %vm357, %v296, 0.0
    %vm468 = vcmask 129024
    %v469 = vsel %vm468, %v297, 0.0
    %v470 = vadd.f32 %v467, %v469
    %471 = vadd.xlane.f32.xlu0 %v470
    %v472 = vpop.xlane.xlu0 %471
    %v473 = vrot.slane %v472, 4
    %v474 = vadd.f32 %v472, %v473
    %v475 = vrot.slane %v474, 2
    %v476 = vadd.f32 %v474, %v475
    %v477 = vrot.slane %v476, 1
    %v478 = vadd.f32 %v476, %v477
    %s479 = vtos %v478
    %s480 = sadd.f32 %s466, %s479
    %v481 = vsel %vm454, %v194, 0.0
    %v482 = vsel %vm454, %v195, 0.0
    %v483 = vadd.f32 %v481, %v482
    %484 = vadd.xlane.f32.xlu0 %v483
    %v485 = vpop.xlane.xlu0 %484
    %v486 = vrot.slane %v485, 4
    %v487 = vadd.f32 %v485, %v486
    %v488 = vrot.slane %v487, 2
    %v489 = vadd.f32 %v487, %v488
    %v490 = vrot.slane %v489, 1
    %v491 = vadd.f32 %v489, %v490
    %s492 = vtos %v491
    %v493 = vsel %vm357, %v298, 0.0
    %v494 = vsel %vm468, %v299, 0.0
    %v495 = vadd.f32 %v493, %v494
    %496 = vadd.xlane.f32.xlu0 %v495
    %v497 = vpop.xlane.xlu0 %496
    %v498 = vrot.slane %v497, 4
    %v499 = vadd.f32 %v497, %v498
    %v500 = vrot.slane %v499, 2
    %v501 = vadd.f32 %v499, %v500
    %v502 = vrot.slane %v501, 1
    %v503 = vadd.f32 %v501, %v502
    %s504 = vtos %v503
    %s505 = sadd.f32 %s492, %s504
    %v506 = vsel %vm454, %v196, 0.0
    %v507 = vsel %vm454, %v197, 0.0
    %v508 = vadd.f32 %v506, %v507
    %509 = vadd.xlane.f32.xlu0 %v508
    %v510 = vpop.xlane.xlu0 %509
    %v511 = vrot.slane %v510, 4
    %v512 = vadd.f32 %v510, %v511
    %v513 = vrot.slane %v512, 2
    %v514 = vadd.f32 %v512, %v513
    %v515 = vrot.slane %v514, 1
    %v516 = vadd.f32 %v514, %v515
    %s517 = vtos %v516
    %v518 = vsel %vm357, %v300, 0.0
    %v519 = vsel %vm468, %v301, 0.0
    %v520 = vadd.f32 %v518, %v519
    %521 = vadd.xlane.f32.xlu0 %v520
    %v522 = vpop.xlane.xlu0 %521
    %v523 = vrot.slane %v522, 4
    %v524 = vadd.f32 %v522, %v523
    %v525 = vrot.slane %v524, 2
    %v526 = vadd.f32 %v524, %v525
    %v527 = vrot.slane %v526, 1
    %v528 = vadd.f32 %v526, %v527
    %s529 = vtos %v528
    %s530 = sadd.f32 %s517, %s529
    %v531 = vsel %vm454, %v198, 0.0
    %v532 = vsel %vm454, %v199, 0.0
    %v533 = vadd.f32 %v531, %v532
    %534 = vadd.xlane.f32.xlu0 %v533
    %v535 = vpop.xlane.xlu0 %534
    %v536 = vrot.slane %v535, 4
    %v537 = vadd.f32 %v535, %v536
    %v538 = vrot.slane %v537, 2
    %v539 = vadd.f32 %v537, %v538
    %v540 = vrot.slane %v539, 1
    %v541 = vadd.f32 %v539, %v540
    %s542 = vtos %v541
    %v543 = vsel %vm357, %v302, 0.0
    %v544 = vsel %vm468, %v303, 0.0
    %v545 = vadd.f32 %v543, %v544
    %546 = vadd.xlane.f32.xlu0 %v545
    %v547 = vpop.xlane.xlu0 %546
    %v548 = vrot.slane %v547, 4
    %v549 = vadd.f32 %v547, %v548
    %v550 = vrot.slane %v549, 2
    %v551 = vadd.f32 %v549, %v550
    %v552 = vrot.slane %v551, 1
    %v553 = vadd.f32 %v551, %v552
    %s554 = vtos %v553
    %s555 = sadd.f32 %s542, %s554
    %v556 = vsel %vm454, %v200, 0.0
    %v557 = vsel %vm454, %v201, 0.0
    %v558 = vadd.f32 %v556, %v557
    %559 = vadd.xlane.f32.xlu0 %v558
    %v560 = vpop.xlane.xlu0 %559
    %v561 = vrot.slane %v560, 4
    %v562 = vadd.f32 %v560, %v561
    %v563 = vrot.slane %v562, 2
    %v564 = vadd.f32 %v562, %v563
    %v565 = vrot.slane %v564, 1
    %v566 = vadd.f32 %v564, %v565
    %s567 = vtos %v566
    %v568 = vsel %vm357, %v304, 0.0
    %v569 = vsel %vm468, %v305, 0.0
    %v570 = vadd.f32 %v568, %v569
    %571 = vadd.xlane.f32.xlu0 %v570
    %v572 = vpop.xlane.xlu0 %571
    %v573 = vrot.slane %v572, 4
    %v574 = vadd.f32 %v572, %v573
    %v575 = vrot.slane %v574, 2
    %v576 = vadd.f32 %v574, %v575
    %v577 = vrot.slane %v576, 1
    %v578 = vadd.f32 %v576, %v577
    %s579 = vtos %v578
    %s580 = sadd.f32 %s567, %s579
    %v581 = vsel %vm454, %v202, 0.0
    %v582 = vsel %vm454, %v203, 0.0
    %v583 = vadd.f32 %v581, %v582
    %584 = vadd.xlane.f32.xlu0 %v583
    %v585 = vpop.xlane.xlu0 %584
    %v586 = vrot.slane %v585, 4
    %v587 = vadd.f32 %v585, %v586
    %v588 = vrot.slane %v587, 2
    %v589 = vadd.f32 %v587, %v588
    %v590 = vrot.slane %v589, 1
    %v591 = vadd.f32 %v589, %v590
    %s592 = vtos %v591
    %v593 = vsel %vm357, %v306, 0.0
    %v594 = vsel %vm468, %v307, 0.0
    %v595 = vadd.f32 %v593, %v594
    %596 = vadd.xlane.f32.xlu0 %v595
    %v597 = vpop.xlane.xlu0 %596
    %v598 = vrot.slane %v597, 4
    %v599 = vadd.f32 %v597, %v598
    %v600 = vrot.slane %v599, 2
    %v601 = vadd.f32 %v599, %v600
    %v602 = vrot.slane %v601, 1
    %v603 = vadd.f32 %v601, %v602
    %s604 = vtos %v603
    %s605 = sadd.f32 %s592, %s604
    %v606 = vsel %vm454, %v204, 0.0
    %v607 = vsel %vm454, %v205, 0.0
    %v608 = vadd.f32 %v606, %v607
    %609 = vadd.xlane.f32.xlu0 %v608
    %v610 = vpop.xlane.xlu0 %609
    %v611 = vrot.slane %v610, 4
    %v612 = vadd.f32 %v610, %v611
    %v613 = vrot.slane %v612, 2
    %v614 = vadd.f32 %v612, %v613
    %v615 = vrot.slane %v614, 1
    %v616 = vadd.f32 %v614, %v615
    %s617 = vtos %v616
    %v618 = vsel %vm357, %v308, 0.0
    %v619 = vsel %vm468, %v309, 0.0
    %v620 = vadd.f32 %v618, %v619
    %621 = vadd.xlane.f32.xlu0 %v620
    %v622 = vpop.xlane.xlu0 %621
    %v623 = vrot.slane %v622, 4
    %v624 = vadd.f32 %v622, %v623
    %v625 = vrot.slane %v624, 2
    %v626 = vadd.f32 %v624, %v625
    %v627 = vrot.slane %v626, 1
    %v628 = vadd.f32 %v626, %v627
    %s629 = vtos %v628
    %s630 = sadd.f32 %s617, %s629
    %v631 = vsel %vm454, %v206, 0.0
    %v632 = vsel %vm454, %v207, 0.0
    %v633 = vadd.f32 %v631, %v632
    %634 = vadd.xlane.f32.xlu0 %v633
    %v635 = vpop.xlane.xlu0 %634
    %v636 = vrot.slane %v635, 4
    %v637 = vadd.f32 %v635, %v636
    %v638 = vrot.slane %v637, 2
    %v639 = vadd.f32 %v637, %v638
    %v640 = vrot.slane %v639, 1
    %v641 = vadd.f32 %v639, %v640
    %s642 = vtos %v641
    %v643 = vsel %vm357, %v310, 0.0
    %v644 = vsel %vm468, %v311, 0.0
    %v645 = vadd.f32 %v643, %v644
    %646 = vadd.xlane.f32.xlu0 %v645
    %v647 = vpop.xlane.xlu0 %646
    %v648 = vrot.slane %v647, 4
    %v649 = vadd.f32 %v647, %v648
    %v650 = vrot.slane %v649, 2
    %v651 = vadd.f32 %v649, %v650
    %v652 = vrot.slane %v651, 1
    %v653 = vadd.f32 %v651, %v652
    %s654 = vtos %v653
    %s655 = sadd.f32 %s642, %s654
    %v656 = vsel %vm454, %v223, 0.0
    %v657 = vsel %vm454, %v224, 0.0
    %v658 = vadd.f32 %v656, %v657
    %659 = vadd.xlane.f32.xlu0 %v658
    %v660 = vpop.xlane.xlu0 %659
    %v661 = vrot.slane %v660, 4
    %v662 = vadd.f32 %v660, %v661
    %v663 = vrot.slane %v662, 2
    %v664 = vadd.f32 %v662, %v663
    %v665 = vrot.slane %v664, 1
    %v666 = vadd.f32 %v664, %v665
    %s667 = vtos %v666
    %v668 = vsel %vm357, %v341, 0.0
    %v669 = vsel %vm468, %v342, 0.0
    %v670 = vadd.f32 %v668, %v669
    %671 = vadd.xlane.f32.xlu0 %v670
    %v672 = vpop.xlane.xlu0 %671
    %v673 = vrot.slane %v672, 4
    %v674 = vadd.f32 %v672, %v673
    %v675 = vrot.slane %v674, 2
    %v676 = vadd.f32 %v674, %v675
    %v677 = vrot.slane %v676, 1
    %v678 = vadd.f32 %v676, %v677
    %s679 = vtos %v678
    %s680 = sadd.f32 %s667, %s679
    %v681 = vsel %vm454, %v225, 0.0
    %v682 = vsel %vm454, %v226, 0.0
    %v683 = vadd.f32 %v681, %v682
    %684 = vadd.xlane.f32.xlu0 %v683
    %v685 = vpop.xlane.xlu0 %684
    %v686 = vrot.slane %v685, 4
    %v687 = vadd.f32 %v685, %v686
    %v688 = vrot.slane %v687, 2
    %v689 = vadd.f32 %v687, %v688
    %v690 = vrot.slane %v689, 1
    %v691 = vadd.f32 %v689, %v690
    %s692 = vtos %v691
    %v693 = vsel %vm357, %v343, 0.0
    %v694 = vsel %vm468, %v344, 0.0
    %v695 = vadd.f32 %v693, %v694
    %696 = vadd.xlane.f32.xlu0 %v695
    %v697 = vpop.xlane.xlu0 %696
    %v698 = vrot.slane %v697, 4
    %v699 = vadd.f32 %v697, %v698
    %v700 = vrot.slane %v699, 2
    %v701 = vadd.f32 %v699, %v700
    %v702 = vrot.slane %v701, 1
    %v703 = vadd.f32 %v701, %v702
    %s704 = vtos %v703
    %s705 = sadd.f32 %s692, %s704
    %v706 = vsel %vm454, %v227, 0.0
    %v707 = vsel %vm454, %v228, 0.0
    %v708 = vadd.f32 %v706, %v707
    %709 = vadd.xlane.f32.xlu0 %v708
    %v710 = vpop.xlane.xlu0 %709
    %v711 = vrot.slane %v710, 4
    %v712 = vadd.f32 %v710, %v711
    %v713 = vrot.slane %v712, 2
    %v714 = vadd.f32 %v712, %v713
    %v715 = vrot.slane %v714, 1
    %v716 = vadd.f32 %v714, %v715
    %s717 = vtos %v716
    %v718 = vsel %vm357, %v345, 0.0
    %v719 = vsel %vm468, %v346, 0.0
    %v720 = vadd.f32 %v718, %v719
    %721 = vadd.xlane.f32.xlu0 %v720
    %v722 = vpop.xlane.xlu0 %721
    %v723 = vrot.slane %v722, 4
    %v724 = vadd.f32 %v722, %v723
    %v725 = vrot.slane %v724, 2
    %v726 = vadd.f32 %v724, %v725
    %v727 = vrot.slane %v726, 1
    %v728 = vadd.f32 %v726, %v727
    %s729 = vtos %v728
    %s730 = sadd.f32 %s717, %s729
    %v731 = vsel %vm454, %v229, 0.0
    %v732 = vsel %vm454, %v230, 0.0
    %v733 = vadd.f32 %v731, %v732
    %734 = vadd.xlane.f32.xlu0 %v733
    %v735 = vpop.xlane.xlu0 %734
    %v736 = vrot.slane %v735, 4
    %v737 = vadd.f32 %v735, %v736
    %v738 = vrot.slane %v737, 2
    %v739 = vadd.f32 %v737, %v738
    %v740 = vrot.slane %v739, 1
    %v741 = vadd.f32 %v739, %v740
    %s742 = vtos %v741
    %v743 = vsel %vm357, %v347, 0.0
    %v744 = vsel %vm468, %v348, 0.0
    %v745 = vadd.f32 %v743, %v744
    %746 = vadd.xlane.f32.xlu0 %v745
    %v747 = vpop.xlane.xlu0 %746
    %v748 = vrot.slane %v747, 4
    %v749 = vadd.f32 %v747, %v748
    %v750 = vrot.slane %v749, 2
    %v751 = vadd.f32 %v749, %v750
    %v752 = vrot.slane %v751, 1
    %v753 = vadd.f32 %v751, %v752
    %s754 = vtos %v753
    %s755 = sadd.f32 %s742, %s754
    %v756 = vsel %vm454, %v231, 0.0
    %v757 = vsel %vm454, %v232, 0.0
    %v758 = vadd.f32 %v756, %v757
    %759 = vadd.xlane.f32.xlu0 %v758
    %v760 = vpop.xlane.xlu0 %759
    %v761 = vrot.slane %v760, 4
    %v762 = vadd.f32 %v760, %v761
    %v763 = vrot.slane %v762, 2
    %v764 = vadd.f32 %v762, %v763
    %v765 = vrot.slane %v764, 1
    %v766 = vadd.f32 %v764, %v765
    %s767 = vtos %v766
    %v768 = vsel %vm357, %v349, 0.0
    %v769 = vsel %vm468, %v350, 0.0
    %v770 = vadd.f32 %v768, %v769
    %771 = vadd.xlane.f32.xlu0 %v770
    %v772 = vpop.xlane.xlu0 %771
    %v773 = vrot.slane %v772, 4
    %v774 = vadd.f32 %v772, %v773
    %v775 = vrot.slane %v774, 2
    %v776 = vadd.f32 %v774, %v775
    %v777 = vrot.slane %v776, 1
    %v778 = vadd.f32 %v776, %v777
    %s779 = vtos %v778
    %s780 = sadd.f32 %s767, %s779
    %v781 = vsel %vm454, %v233, 0.0
    %v782 = vsel %vm454, %v234, 0.0
    %v783 = vadd.f32 %v781, %v782
    %784 = vadd.xlane.f32.xlu0 %v783
    %v785 = vpop.xlane.xlu0 %784
    %v786 = vrot.slane %v785, 4
    %v787 = vadd.f32 %v785, %v786
    %v788 = vrot.slane %v787, 2
    %v789 = vadd.f32 %v787, %v788
    %v790 = vrot.slane %v789, 1
    %v791 = vadd.f32 %v789, %v790
    %s792 = vtos %v791
    %v793 = vsel %vm357, %v351, 0.0
    %v794 = vsel %vm468, %v352, 0.0
    %v795 = vadd.f32 %v793, %v794
    %796 = vadd.xlane.f32.xlu0 %v795
    %v797 = vpop.xlane.xlu0 %796
    %v798 = vrot.slane %v797, 4
    %v799 = vadd.f32 %v797, %v798
    %v800 = vrot.slane %v799, 2
    %v801 = vadd.f32 %v799, %v800
    %v802 = vrot.slane %v801, 1
    %v803 = vadd.f32 %v801, %v802
    %s804 = vtos %v803
    %s805 = sadd.f32 %s792, %s804
    %v806 = vsel %vm454, %v235, 0.0
    %v807 = vsel %vm454, %v236, 0.0
    %v808 = vadd.f32 %v806, %v807
    %809 = vadd.xlane.f32.xlu0 %v808
    %v810 = vpop.xlane.xlu0 %809
    %v811 = vrot.slane %v810, 4
    %v812 = vadd.f32 %v810, %v811
    %v813 = vrot.slane %v812, 2
    %v814 = vadd.f32 %v812, %v813
    %v815 = vrot.slane %v814, 1
    %v816 = vadd.f32 %v814, %v815
    %s817 = vtos %v816
    %v818 = vsel %vm357, %v353, 0.0
    %v819 = vsel %vm468, %v354, 0.0
    %v820 = vadd.f32 %v818, %v819
    %821 = vadd.xlane.f32.xlu0 %v820
    %v822 = vpop.xlane.xlu0 %821
    %v823 = vrot.slane %v822, 4
    %v824 = vadd.f32 %v822, %v823
    %v825 = vrot.slane %v824, 2
    %v826 = vadd.f32 %v824, %v825
    %v827 = vrot.slane %v826, 1
    %v828 = vadd.f32 %v826, %v827
    %s829 = vtos %v828
    %s830 = sadd.f32 %s817, %s829
    %v831 = vsel %vm454, %v237, 0.0
    %v832 = vsel %vm454, %v238, 0.0
    %v833 = vadd.f32 %v831, %v832
    %834 = vadd.xlane.f32.xlu0 %v833
    %v835 = vpop.xlane.xlu0 %834
    %v836 = vrot.slane %v835, 4
    %v837 = vadd.f32 %v835, %v836
    %v838 = vrot.slane %v837, 2
    %v839 = vadd.f32 %v837, %v838
    %v840 = vrot.slane %v839, 1
    %v841 = vadd.f32 %v839, %v840
    %s842 = vtos %v841
    %v843 = vsel %vm357, %v355, 0.0
    %v844 = vsel %vm468, %v356, 0.0
    %v845 = vadd.f32 %v843, %v844
    %846 = vadd.xlane.f32.xlu0 %v845
    %v847 = vpop.xlane.xlu0 %846
    %v848 = vrot.slane %v847, 4
    %v849 = vadd.f32 %v847, %v848
    %v850 = vrot.slane %v849, 2
    %v851 = vadd.f32 %v849, %v850
    %v852 = vrot.slane %v851, 1
    %v853 = vadd.f32 %v851, %v852
    %s854 = vtos %v853
    %s855 = sadd.f32 %s842, %s854
    %p856 = scmp.eq.s32.totalorder 0, 0
    // Predicated region
    $region18: #{tpu_custom_call.1} parent=1 // pred_check
      %p857 = pneg %p856
    $region19: #{tpu_custom_call.1} parent=1 // pred_check_branch
      %859 = sbr.rel (%p857) target = $region21
    $region20: #{tpu_custom_call.1} parent=1 // pred_region
      %s860 = scalar_lea.smem [#allocation8], 0
      %861 = sst [smem:[%s860]] %s369
      %s862 = scalar_lea.smem [#allocation11], 0
      %863 = sst [smem:[%s862]] %s480
      %s864 = scalar_lea.smem [#allocation9], 0
      %865 = sst [smem:[%s864]] %s680
      %s866 = scalar_lea.smem [#allocation8], 1
      %867 = sst [smem:[%s866]] %s381
      %s868 = scalar_lea.smem [#allocation11], 1
      %869 = sst [smem:[%s868]] %s505
      %s870 = scalar_lea.smem [#allocation9], 1
      %871 = sst [smem:[%s870]] %s705
      %s872 = scalar_lea.smem [#allocation8], 2
      %873 = sst [smem:[%s872]] %s393
      %s874 = scalar_lea.smem [#allocation11], 2
      %875 = sst [smem:[%s874]] %s530
      %s876 = scalar_lea.smem [#allocation9], 2
      %877 = sst [smem:[%s876]] %s730
      %s878 = scalar_lea.smem [#allocation8], 3
      %879 = sst [smem:[%s878]] %s405
      %s880 = scalar_lea.smem [#allocation11], 3
      %881 = sst [smem:[%s880]] %s555
      %s882 = scalar_lea.smem [#allocation9], 3
      %883 = sst [smem:[%s882]] %s755
      %s884 = scalar_lea.smem [#allocation8], 4
      %885 = sst [smem:[%s884]] %s417
      %s886 = scalar_lea.smem [#allocation11], 4
      %887 = sst [smem:[%s886]] %s580
      %s888 = scalar_lea.smem [#allocation9], 4
      %889 = sst [smem:[%s888]] %s780
      %s890 = scalar_lea.smem [#allocation8], 5
      %891 = sst [smem:[%s890]] %s429
      %s892 = scalar_lea.smem [#allocation11], 5
      %893 = sst [smem:[%s892]] %s605
      %s894 = scalar_lea.smem [#allocation9], 5
      %895 = sst [smem:[%s894]] %s805
      %s896 = scalar_lea.smem [#allocation8], 6
      %897 = sst [smem:[%s896]] %s441
      %s898 = scalar_lea.smem [#allocation11], 6
      %899 = sst [smem:[%s898]] %s630
      %s900 = scalar_lea.smem [#allocation9], 6
      %901 = sst [smem:[%s900]] %s830
      %s902 = scalar_lea.smem [#allocation8], 7
      %903 = sst [smem:[%s902]] %s453
      %s904 = scalar_lea.smem [#allocation11], 7
      %905 = sst [smem:[%s904]] %s655
      %s906 = scalar_lea.smem [#allocation9], 7
      %907 = sst [smem:[%s906]] %s855
    $region21: #{tpu_custom_call.1} parent=1 // pred_fallthru
      _
    // Predicated region
    $region22: #{tpu_custom_call.1} parent=1 // pred_check
      _
    $region23: #{tpu_custom_call.1} parent=1 // pred_check_branch
      %909 = sbr.rel (0) target = $region25
    $region24: #{tpu_custom_call.1} parent=1 // pred_region
      %911 = vsyncadd [#allocation5], 0
      %s913 = sshll.u32 %s2, 4
      %s914 = int_to_ptr.hbm [resolvable:$true] %s913
      %916 = dma.smem_to_hbm [#allocation8], 16, %s914, [#allocation5]
    $region25: #{tpu_custom_call.1} parent=1 // pred_fallthru
      _
    // Predicated region
    $region26: #{tpu_custom_call.1} parent=1 // pred_check
      _
    $region27: #{tpu_custom_call.1} parent=1 // pred_check_branch
      %918 = sbr.rel (0) target = $region29
    $region28: #{tpu_custom_call.1} parent=1 // pred_region
      %920 = vsyncadd [#allocation10], 0
      %s922 = sshll.u32 %s3, 4
      %s923 = int_to_ptr.hbm [resolvable:$true] %s922
      %925 = dma.smem_to_hbm [#allocation9], 16, %s923, [#allocation10]
    $region29: #{tpu_custom_call.1} parent=1 // pred_fallthru
      _
    // Predicated region
    $region30: #{tpu_custom_call.1} parent=1 // pred_check
      _
    $region31: #{tpu_custom_call.1} parent=1 // pred_check_branch
      %927 = sbr.rel (0) target = $region33
    $region32: #{tpu_custom_call.1} parent=1 // pred_region
      %929 = vsyncadd [#allocation10], 0
      %s931 = sshll.u32 %s4, 4
      %s932 = int_to_ptr.hbm [resolvable:$true] %s931
      %934 = dma.smem_to_hbm [#allocation11], 16, %s932, [#allocation10]
    $region33: #{tpu_custom_call.1} parent=1 // pred_fallthru
      _
    // Predicated region
    $region34: #{tpu_custom_call.1} parent=1 // pred_check
      _
    $region35: #{tpu_custom_call.1} parent=1 // pred_check_branch
      %936 = sbr.rel (0) target = $region37
    $region36: #{tpu_custom_call.1} parent=1 // pred_region
      %938 = dma.done [#allocation5], 16
    $region37: #{tpu_custom_call.1} parent=1 // pred_fallthru
      _
    // Predicated region
    $region38: #{tpu_custom_call.1} parent=1 // pred_check
      _
    $region39: #{tpu_custom_call.1} parent=1 // pred_check_branch
      %940 = sbr.rel (0) target = $region41
    $region40: #{tpu_custom_call.1} parent=1 // pred_region
      %942 = dma.done [#allocation10], 16
    $region41: #{tpu_custom_call.1} parent=1 // pred_fallthru
      _
    // Predicated region
    $region42: #{tpu_custom_call.1} parent=1 // pred_check
      _
    $region43: #{tpu_custom_call.1} parent=1 // pred_check_branch
      %944 = sbr.rel (0) target = $region45
    $region44: #{tpu_custom_call.1} parent=1 // pred_region
      %946 = dma.done [#allocation10], 16
    $region45: #{tpu_custom_call.1} parent=1 // pred_fallthru
      _
    %947 = sfence
    %948 = vsyncpa [#allocation4], 1
    %949 = vsyncpa [#allocation7], 1
    %950 = vsyncpa [#allocation5], 1
    %951 = vsyncpa [#allocation10], 1

</llo_original>
